<compile_context>
chip_gen: v5e
topology: v5e:2x2
jax: 0.10.0
libtpu: 0.0.40
codegen_flags: <defaults>
</compile_context>

<pallas_src>
import jax
import jax.numpy as jnp
import numpy as np
from jax.experimental import pallas as pl
from jax.experimental.pallas import tpu as pltpu


# -----------------------------------------------------------------------------
# Fused kernel: one-hot embedding + wavefronted stacked GRU + MLP head.
# -----------------------------------------------------------------------------
def char_rnn_kernel(ids_ref, emb_ref, h0_ref, *rest):
    """rest = [wih0 (E,3H), whh0 (H,3H), bx0 (1,3H), bhn0 (1,H),          # layer 0
               (wcat_l (2H,4H), bx_l (1,3H), bhn_l (1,H)) for l in 1..L-1,
               w1 (H,H), b1 (1,H), w2 (H,V), b2 (1,V),                     # head
               logits_ref (N,V), h1_ref (L,B,H)]                           # outputs
    ids (N,1) int32 time-major; emb (V,E); h0 (L,B,H)."""
    n_layer, B, H = h0_ref.shape
    V, E = emb_ref.shape

    wih0_ref, whh0_ref, bx0_ref, bhn0_ref = rest[0:4]
    pos = 4
    deep_refs = []
    for _ in range(1, n_layer):
        deep_refs.append(rest[pos:pos + 3])
        pos += 3
    w1_ref, b1_ref, w2_ref, b2_ref, logits_ref, h1_ref = rest[pos:pos + 6]

    N = logits_ref.shape[0]
    T = N // B

    def sig(x):  # sigmoid via a single tanh EUP op
        return 0.5 * jnp.tanh(0.5 * x) + 0.5

    # ---- Embedding gather as a one-hot matmul (single MXU push). ----
    ids = ids_ref[...]                                          # (N, 1) int32
    onehot = (jax.lax.broadcasted_iota(jnp.int32, (N, V), 1) == ids
              ).astype(jnp.float32)                             # (N, V)
    x0 = jnp.dot(onehot, emb_ref[...],
                 preferred_element_type=jnp.float32)            # (N, E)

    # ---- Layer 0: hoisted input projection over the whole sequence. ----
    # Columns packed [r | z | n]; r/z biases already include b_ih + b_hh.
    gx0 = jnp.dot(x0, wih0_ref[...],
                  preferred_element_type=jnp.float32) + bx0_ref[...]   # (N, 3H)
    whh0 = whh0_ref[...]                                        # (H, 3H)
    bhn0 = bhn0_ref[...]                                        # (1, H)

    # Deep-layer weights loaded once (held in vregs across the recurrence).
    deep_w = [(wc[...], bx[...], bhn[...]) for (wc, bx, bhn) in deep_refs]

    # Register-carried hidden state per layer.
    hs = [h0_ref[l].astype(jnp.float32) for l in range(n_layer)]

    ys = []  # last-layer output per timestep (collected in registers)

    for t in range(T):
        lo = t * B

        # --- layer 0 step: single recurrent matmul h @ (H, 3H). ---
        h = hs[0]
        gh = jnp.dot(h, whh0, preferred_element_type=jnp.float32)   # (B, 3H)
        pre = gx0[lo:lo + B, :]
        rz = sig(pre[:, :2 * H] + gh[:, :2 * H])
        r = rz[:, :H]
        z = rz[:, H:]
        n = jnp.tanh(pre[:, 2 * H:] + r * (gh[:, 2 * H:] + bhn0))
        h = n + z * (h - n)                                         # (1-z)*n + z*h
        hs[0] = h
        y = h

        # --- deeper layers (wavefront): one (B,2H)@(2H,4H) matmul per step. ---
        for li, (wcat, bx, bhn) in enumerate(deep_w, start=1):
            hprev = hs[li]
            xin = jnp.concatenate([y, hprev], axis=1)               # (B, 2H)
            g = jnp.dot(xin, wcat, preferred_element_type=jnp.float32)  # (B, 4H)
            rz = sig(g[:, :2 * H] + bx[:, :2 * H])
            r = rz[:, :H]
            z = rz[:, H:]
            n = jnp.tanh(g[:, 2 * H:3 * H] + bx[:, 2 * H:3 * H]
                         + r * (g[:, 3 * H:] + bhn))
            hnew = n + z * (hprev - n)
            hs[li] = hnew
            y = hnew

        ys.append(y)

    # ---- Final hidden states: one store per layer. ----
    for l in range(n_layer):
        h1_ref[l] = hs[l]

    # ---- Output head over all T*B rows: Linear -> ReLU -> Linear. ----
    seq = jnp.concatenate(ys, axis=0)                               # (N, H)
    hid = jnp.dot(seq, w1_ref[...], preferred_element_type=jnp.float32) + b1_ref[...]
    hid = jnp.maximum(hid, 0.0)
    logits_ref[...] = (jnp.dot(hid, w2_ref[...],
                               preferred_element_type=jnp.float32) + b2_ref[...])


# -----------------------------------------------------------------------------
# Forward wrapper: one grid-less pallas_call + a tiny output transpose.
# -----------------------------------------------------------------------------
@jax.jit
def char_rnn_forward(packed, x_in, h0):
    """x_in: (B, T) int32 token ids; h0: (n_layer, B, H) f32.
    Returns (x2: (B, T, V) logits, h1: (n_layer, B, H))."""
    B, T = x_in.shape
    n_layer, _, H = h0.shape
    V, E = packed["emb"].shape
    N = T * B

    # Token ids, time-major, as a (N, 1) int32 VMEM column (clamped to range;
    # with the one-hot gather an out-of-range id would give a zero row anyway).
    ids_tm = jnp.clip(jnp.transpose(x_in.astype(jnp.int32), (1, 0)).reshape(N, 1),
                      0, V - 1)

    inputs = [ids_tm, packed["emb"], h0]
    l0 = packed["gru"][0]
    inputs += [l0["wih"], l0["whh"], l0["bx"], l0["bhn"]]
    for lp in packed["gru"][1:]:
        inputs += [lp["wcat"], lp["bx"], lp["bhn"]]
    inputs += [packed["w1"], packed["b1"], packed["w2"], packed["b2"]]

    logits_tm, h1 = pl.pallas_call(
        char_rnn_kernel,
        out_shape=(jax.ShapeDtypeStruct((N, V), jnp.float32),
                   jax.ShapeDtypeStruct((n_layer, B, H), jnp.float32)),
        in_specs=[pl.BlockSpec(memory_space=pltpu.MemorySpace.VMEM)] * len(inputs),
        out_specs=(pl.BlockSpec(memory_space=pltpu.MemorySpace.VMEM),
                   pl.BlockSpec(memory_space=pltpu.MemorySpace.VMEM)),
    )(*inputs)

    # (T*B, V) time-major -> (B, T, V) batch_first (tiny, ~1 KiB).
    x2 = jnp.transpose(logits_tm.reshape(T, B, V), (1, 0, 2))
    return x2, h1


# -----------------------------------------------------------------------------
# Parameters: PyTorch-layout init + one-time packing to kernel layout.
# -----------------------------------------------------------------------------
def init_torch_params(key, dim_x0, dim_x1, dim_h, n_layer):
    """Parameters in the PyTorch nn.Module layout (used by the reference)."""
    keys = jax.random.split(key, 1 + 4 * n_layer + 4)
    k_iter = iter(keys)

    def u(k, shape, scale):
        return jax.random.uniform(k, shape, jnp.float32, -scale, scale)

    p = {"emb": jax.random.normal(next(k_iter), (dim_x0, dim_x1), jnp.float32)}
    s = 1.0 / np.sqrt(dim_h)
    p["gru"] = []
    for layer in range(n_layer):
        d_in = dim_x1 if layer == 0 else dim_h
        p["gru"].append({
            "w_ih": u(next(k_iter), (3 * dim_h, d_in), s),   # gate order [r, z, n]
            "w_hh": u(next(k_iter), (3 * dim_h, dim_h), s),
            "b_ih": u(next(k_iter), (3 * dim_h,), s),
            "b_hh": u(next(k_iter), (3 * dim_h,), s),
        })
    p["w_out1"] = u(next(k_iter), (dim_h, dim_h), s)
    p["b_out1"] = u(next(k_iter), (dim_h,), s)
    p["w_out2"] = u(next(k_iter), (dim_x0, dim_h), s)
    p["b_out2"] = u(next(k_iter), (dim_x0,), s)
    return p


def pack_params(tp):
    """One-time layout plumbing (outside the forward):
    layer 0: wih (D,3H) [r|z|n], whh (H,3H) [r|z|n];
    layer>=1: wcat (D+H, 4H) columns [r | z | n_x | n_h], rows [x ; h];
    bx (1,3H) = [b_ir+b_hr, b_iz+b_hz, b_in]; bhn (1,H); head pre-transposed."""
    H = tp["gru"][0]["w_hh"].shape[1]
    packed = {"emb": tp["emb"], "gru": []}
    for li, lp in enumerate(tp["gru"]):
        w_ih, w_hh = lp["w_ih"], lp["w_hh"]
        b_ih, b_hh = lp["b_ih"], lp["b_hh"]
        d_in = w_ih.shape[1]
        wih_T = [w_ih[g * H:(g + 1) * H, :].T for g in range(3)]   # each (D, H)
        whh_T = [w_hh[g * H:(g + 1) * H, :].T for g in range(3)]   # each (H, H)
        bx = jnp.concatenate([b_ih[0:H] + b_hh[0:H],               # r
                              b_ih[H:2 * H] + b_hh[H:2 * H],       # z
                              b_ih[2 * H:3 * H]],                  # n (input part)
                             axis=0).reshape(1, 3 * H)
        bhn = b_hh[2 * H:3 * H].reshape(1, H)                      # n (hidden part)
        if li == 0:
            packed["gru"].append({
                "wih": jnp.concatenate(wih_T, axis=1),             # (D, 3H)
                "whh": jnp.concatenate(whh_T, axis=1),             # (H, 3H)
                "bx": bx, "bhn": bhn,
            })
        else:
            zeros_x = jnp.zeros((d_in, H), jnp.float32)
            zeros_h = jnp.zeros((H, H), jnp.float32)
            top = jnp.concatenate([wih_T[0], wih_T[1], wih_T[2], zeros_x], axis=1)
            bot = jnp.concatenate([whh_T[0], whh_T[1], zeros_h, whh_T[2]], axis=1)
            packed["gru"].append({
                "wcat": jnp.concatenate([top, bot], axis=0),       # (D+H, 4H)
                "bx": bx, "bhn": bhn,
            })
    packed["w1"] = tp["w_out1"].T               # (H, H)
    packed["b1"] = tp["b_out1"].reshape(1, -1)  # (1, H)
    packed["w2"] = tp["w_out2"].T               # (H, V)
    packed["b2"] = tp["b_out2"].reshape(1, -1)  # (1, V)
    return packed


# -----------------------------------------------------------------------------
# Pure-JAX reference (mirrors PyTorch CharRNN.forward, eval mode).
# -----------------------------------------------------------------------------
def char_rnn_reference(tp, x_in, h0):
    x = jnp.take(tp["emb"], x_in, axis=0)      # (B, T, E)
    B, T, _ = x.shape
    H = tp["gru"][0]["w_hh"].shape[1]
    h_finals, inp = [], x
    for li, lp in enumerate(tp["gru"]):
        h = h0[li]
        ys = []
        for t in range(T):
            xt = inp[:, t, :]
            gx = xt @ lp["w_ih"].T + lp["b_ih"]
            gh = h @ lp["w_hh"].T + lp["b_hh"]
            r = jax.nn.sigmoid(gx[:, :H] + gh[:, :H])
            z = jax.nn.sigmoid(gx[:, H:2 * H] + gh[:, H:2 * H])
            n = jnp.tanh(gx[:, 2 * H:] + r * gh[:, 2 * H:])
            h = (1.0 - z) * n + z * h
            ys.append(h)
        inp = jnp.stack(ys, axis=1)            # (B, T, H)
        h_finals.append(h)
    h1 = jnp.stack(h_finals, axis=0)
    hid = jnp.maximum(inp @ tp["w_out1"].T + tp["b_out1"], 0.0)
    x2 = hid @ tp["w_out2"].T + tp["b_out2"]
    return x2, h1


if __name__ == "__main__":
    # CharRNN hyperparameters (small, consistent with the module).
    dim_x0 = 16    # vocab size
    dim_x1 = 16    # embedding dim
    dim_h = 32     # hidden dim
    n_layer = 2
    batch, seq = 2, 8

    key = jax.random.PRNGKey(0)
    k_params, k_x, k_h = jax.random.split(key, 3)
    torch_params = init_torch_params(k_params, dim_x0, dim_x1, dim_h, n_layer)
    packed = pack_params(torch_params)

    x_in = jax.random.randint(k_x, (batch, seq), 0, dim_x0, dtype=jnp.int32)
    h0 = 0.5 * jax.random.normal(k_h, (n_layer, batch, dim_h), jnp.float32)

    x2, h1 = char_rnn_forward(packed, x_in, h0)
    jax.block_until_ready((x2, h1))

    assert x2.shape == (batch, seq, dim_x0), x2.shape
    assert h1.shape == (n_layer, batch, dim_h), h1.shape

    # Numerical check against the pure-JAX reference of the PyTorch module.
    x2_ref, h1_ref = char_rnn_reference(torch_params, x_in, h0)
    assert float(jnp.max(jnp.abs(x2 - x2_ref))) < 1e-3
    assert float(jnp.max(jnp.abs(h1 - h1_ref))) < 1e-3

    print("KERNEL_OK")
</pallas_src>

<mosaic_0001>
module attributes {stable_mosaic.version = 11 : i64} {
  func.func @char_rnn_kernel(%arg0: memref<16x1xi32, #tpu.memory_space<vmem>>, %arg1: memref<16x16xf32, #tpu.memory_space<vmem>>, %arg2: memref<2x2x32xf32, #tpu.memory_space<vmem>>, %arg3: memref<16x96xf32, #tpu.memory_space<vmem>>, %arg4: memref<32x96xf32, #tpu.memory_space<vmem>>, %arg5: memref<1x96xf32, #tpu.memory_space<vmem>>, %arg6: memref<1x32xf32, #tpu.memory_space<vmem>>, %arg7: memref<64x128xf32, #tpu.memory_space<vmem>>, %arg8: memref<1x96xf32, #tpu.memory_space<vmem>>, %arg9: memref<1x32xf32, #tpu.memory_space<vmem>>, %arg10: memref<32x32xf32, #tpu.memory_space<vmem>>, %arg11: memref<1x32xf32, #tpu.memory_space<vmem>>, %arg12: memref<32x16xf32, #tpu.memory_space<vmem>>, %arg13: memref<1x16xf32, #tpu.memory_space<vmem>>, %arg14: memref<16x16xf32, #tpu.memory_space<vmem>>, %arg15: memref<2x2x32xf32, #tpu.memory_space<vmem>>) attributes {dimension_semantics = [], scalar_prefetch = 0 : i64, scratch_operands = 0 : i64, tpu.core_type = #tpu.core_type<tc>} {
    %c0 = arith.constant 0 : index
    %c0_0 = arith.constant 0 : index
    %0 = vector.load %arg0[%c0, %c0_0] : memref<16x1xi32, #tpu.memory_space<vmem>>, vector<16x1xi32>
    %1 = tpu.iota {dimensions = array<i32: 1>} : vector<16x16xi32>
    %2 = vector.broadcast %0 : vector<16x1xi32> to vector<16x16xi32>
    %3 = arith.cmpi eq, %1, %2 : vector<16x16xi32>
    %4 = arith.extui %3 : vector<16x16xi1> to vector<16x16xi32>
    %5 = arith.sitofp %4 : vector<16x16xi32> to vector<16x16xf32>
    %c0_1 = arith.constant 0 : index
    %c0_2 = arith.constant 0 : index
    %6 = vector.load %arg1[%c0_1, %c0_2] : memref<16x16xf32, #tpu.memory_space<vmem>>, vector<16x16xf32>
    %cst = arith.constant dense<0.000000e+00> : vector<16x16xf32>
    %7 = tpu.matmul %5, %6, %cst {dimension_numbers = #tpu.dot_dimension_numbers<[1], [0], [0], [1], [0, 0, 1, 1], [], []>} : vector<16x16xf32>, vector<16x16xf32>, vector<16x16xf32> -> vector<16x16xf32>
    %c0_3 = arith.constant 0 : index
    %c0_4 = arith.constant 0 : index
    %8 = vector.load %arg3[%c0_3, %c0_4] : memref<16x96xf32, #tpu.memory_space<vmem>>, vector<16x96xf32>
    %cst_5 = arith.constant dense<0.000000e+00> : vector<16x96xf32>
    %9 = tpu.matmul %7, %8, %cst_5 {dimension_numbers = #tpu.dot_dimension_numbers<[1], [0], [0], [1], [0, 0, 1, 1], [], []>} : vector<16x16xf32>, vector<16x96xf32>, vector<16x96xf32> -> vector<16x96xf32>
    %c0_6 = arith.constant 0 : index
    %c0_7 = arith.constant 0 : index
    %10 = vector.load %arg5[%c0_6, %c0_7] : memref<1x96xf32, #tpu.memory_space<vmem>>, vector<1x96xf32>
    %11 = vector.broadcast %10 : vector<1x96xf32> to vector<16x96xf32>
    %12 = arith.addf %9, %11 : vector<16x96xf32>
    %c0_8 = arith.constant 0 : index
    %c0_9 = arith.constant 0 : index
    %13 = vector.load %arg4[%c0_8, %c0_9] : memref<32x96xf32, #tpu.memory_space<vmem>>, vector<32x96xf32>
    %c0_10 = arith.constant 0 : index
    %c0_11 = arith.constant 0 : index
    %14 = vector.load %arg6[%c0_10, %c0_11] : memref<1x32xf32, #tpu.memory_space<vmem>>, vector<1x32xf32>
    %c0_12 = arith.constant 0 : index
    %c0_13 = arith.constant 0 : index
    %15 = vector.load %arg7[%c0_12, %c0_13] : memref<64x128xf32, #tpu.memory_space<vmem>>, vector<64x128xf32>
    %c0_14 = arith.constant 0 : index
    %c0_15 = arith.constant 0 : index
    %16 = vector.load %arg8[%c0_14, %c0_15] : memref<1x96xf32, #tpu.memory_space<vmem>>, vector<1x96xf32>
    %c0_16 = arith.constant 0 : index
    %c0_17 = arith.constant 0 : index
    %17 = vector.load %arg9[%c0_16, %c0_17] : memref<1x32xf32, #tpu.memory_space<vmem>>, vector<1x32xf32>
    %c0_18 = arith.constant 0 : index
    %c0_19 = arith.constant 0 : index
    %c0_20 = arith.constant 0 : index
    %18 = vector.load %arg2[%c0_18, %c0_19, %c0_20] : memref<2x2x32xf32, #tpu.memory_space<vmem>>, vector<1x2x32xf32>
    %19 = vector.shape_cast %18 : vector<1x2x32xf32> to vector<2x32xf32>
    %c1 = arith.constant 1 : index
    %c0_21 = arith.constant 0 : index
    %c0_22 = arith.constant 0 : index
    %20 = vector.load %arg2[%c1, %c0_21, %c0_22] : memref<2x2x32xf32, #tpu.memory_space<vmem>>, vector<1x2x32xf32>
    %21 = vector.shape_cast %20 : vector<1x2x32xf32> to vector<2x32xf32>
    %cst_23 = arith.constant dense<0.000000e+00> : vector<2x96xf32>
    %22 = tpu.matmul %19, %13, %cst_23 {dimension_numbers = #tpu.dot_dimension_numbers<[1], [0], [0], [1], [0, 0, 1, 1], [], []>} : vector<2x32xf32>, vector<32x96xf32>, vector<2x96xf32> -> vector<2x96xf32>
    %23 = vector.extract_strided_slice %12 {offsets = [0, 0], sizes = [2, 96], strides = [1, 1]} : vector<16x96xf32> to vector<2x96xf32>
    %24 = vector.extract_strided_slice %23 {offsets = [0, 0], sizes = [2, 64], strides = [1, 1]} : vector<2x96xf32> to vector<2x64xf32>
    %25 = vector.extract_strided_slice %22 {offsets = [0, 0], sizes = [2, 64], strides = [1, 1]} : vector<2x96xf32> to vector<2x64xf32>
    %26 = arith.addf %24, %25 : vector<2x64xf32>
    %cst_24 = arith.constant 5.000000e-01 : f32
    %27 = vector.broadcast %cst_24 : f32 to vector<2x64xf32>
    %28 = arith.mulf %27, %26 : vector<2x64xf32>
    %29 = math.tanh %28 : vector<2x64xf32>
    %cst_25 = arith.constant 5.000000e-01 : f32
    %30 = vector.broadcast %cst_25 : f32 to vector<2x64xf32>
    %31 = arith.mulf %30, %29 : vector<2x64xf32>
    %cst_26 = arith.constant 5.000000e-01 : f32
    %32 = vector.broadcast %cst_26 : f32 to vector<2x64xf32>
    %33 = arith.addf %31, %32 : vector<2x64xf32>
    %34 = vector.extract_strided_slice %33 {offsets = [0, 0], sizes = [2, 32], strides = [1, 1]} : vector<2x64xf32> to vector<2x32xf32>
    %35 = vector.extract_strided_slice %33 {offsets = [0, 32], sizes = [2, 32], strides = [1, 1]} : vector<2x64xf32> to vector<2x32xf32>
    %36 = vector.extract_strided_slice %23 {offsets = [0, 64], sizes = [2, 32], strides = [1, 1]} : vector<2x96xf32> to vector<2x32xf32>
    %37 = vector.extract_strided_slice %22 {offsets = [0, 64], sizes = [2, 32], strides = [1, 1]} : vector<2x96xf32> to vector<2x32xf32>
    %38 = vector.broadcast %14 : vector<1x32xf32> to vector<2x32xf32>
    %39 = arith.addf %37, %38 : vector<2x32xf32>
    %40 = arith.mulf %34, %39 : vector<2x32xf32>
    %41 = arith.addf %36, %40 : vector<2x32xf32>
    %42 = math.tanh %41 : vector<2x32xf32>
    %43 = arith.subf %19, %42 : vector<2x32xf32>
    %44 = arith.mulf %35, %43 : vector<2x32xf32>
    %45 = arith.addf %42, %44 : vector<2x32xf32>
    %46 = tpu.concatenate %45, %21 in 1 : vector<2x32xf32>, vector<2x32xf32> -> vector<2x64xf32>
    %cst_27 = arith.constant dense<0.000000e+00> : vector<2x128xf32>
    %47 = tpu.matmul %46, %15, %cst_27 {dimension_numbers = #tpu.dot_dimension_numbers<[1], [0], [0], [1], [0, 0, 1, 1], [], []>} : vector<2x64xf32>, vector<64x128xf32>, vector<2x128xf32> -> vector<2x128xf32>
    %48 = vector.extract_strided_slice %47 {offsets = [0, 0], sizes = [2, 64], strides = [1, 1]} : vector<2x128xf32> to vector<2x64xf32>
    %49 = vector.extract_strided_slice %16 {offsets = [0, 0], sizes = [1, 64], strides = [1, 1]} : vector<1x96xf32> to vector<1x64xf32>
    %50 = vector.broadcast %49 : vector<1x64xf32> to vector<2x64xf32>
    %51 = arith.addf %48, %50 : vector<2x64xf32>
    %cst_28 = arith.constant 5.000000e-01 : f32
    %52 = vector.broadcast %cst_28 : f32 to vector<2x64xf32>
    %53 = arith.mulf %52, %51 : vector<2x64xf32>
    %54 = math.tanh %53 : vector<2x64xf32>
    %cst_29 = arith.constant 5.000000e-01 : f32
    %55 = vector.broadcast %cst_29 : f32 to vector<2x64xf32>
    %56 = arith.mulf %55, %54 : vector<2x64xf32>
    %cst_30 = arith.constant 5.000000e-01 : f32
    %57 = vector.broadcast %cst_30 : f32 to vector<2x64xf32>
    %58 = arith.addf %56, %57 : vector<2x64xf32>
    %59 = vector.extract_strided_slice %58 {offsets = [0, 0], sizes = [2, 32], strides = [1, 1]} : vector<2x64xf32> to vector<2x32xf32>
    %60 = vector.extract_strided_slice %58 {offsets = [0, 32], sizes = [2, 32], strides = [1, 1]} : vector<2x64xf32> to vector<2x32xf32>
    %61 = vector.extract_strided_slice %47 {offsets = [0, 64], sizes = [2, 32], strides = [1, 1]} : vector<2x128xf32> to vector<2x32xf32>
    %62 = vector.extract_strided_slice %16 {offsets = [0, 64], sizes = [1, 32], strides = [1, 1]} : vector<1x96xf32> to vector<1x32xf32>
    %63 = vector.broadcast %62 : vector<1x32xf32> to vector<2x32xf32>
    %64 = arith.addf %61, %63 : vector<2x32xf32>
    %65 = vector.extract_strided_slice %47 {offsets = [0, 96], sizes = [2, 32], strides = [1, 1]} : vector<2x128xf32> to vector<2x32xf32>
    %66 = vector.broadcast %17 : vector<1x32xf32> to vector<2x32xf32>
    %67 = arith.addf %65, %66 : vector<2x32xf32>
    %68 = arith.mulf %59, %67 : vector<2x32xf32>
    %69 = arith.addf %64, %68 : vector<2x32xf32>
    %70 = math.tanh %69 : vector<2x32xf32>
    %71 = arith.subf %21, %70 : vector<2x32xf32>
    %72 = arith.mulf %60, %71 : vector<2x32xf32>
    %73 = arith.addf %70, %72 : vector<2x32xf32>
    %cst_31 = arith.constant dense<0.000000e+00> : vector<2x96xf32>
    %74 = tpu.matmul %45, %13, %cst_31 {dimension_numbers = #tpu.dot_dimension_numbers<[1], [0], [0], [1], [0, 0, 1, 1], [], []>} : vector<2x32xf32>, vector<32x96xf32>, vector<2x96xf32> -> vector<2x96xf32>
    %75 = vector.extract_strided_slice %12 {offsets = [2, 0], sizes = [2, 96], strides = [1, 1]} : vector<16x96xf32> to vector<2x96xf32>
    %76 = vector.extract_strided_slice %75 {offsets = [0, 0], sizes = [2, 64], strides = [1, 1]} : vector<2x96xf32> to vector<2x64xf32>
    %77 = vector.extract_strided_slice %74 {offsets = [0, 0], sizes = [2, 64], strides = [1, 1]} : vector<2x96xf32> to vector<2x64xf32>
    %78 = arith.addf %76, %77 : vector<2x64xf32>
    %cst_32 = arith.constant 5.000000e-01 : f32
    %79 = vector.broadcast %cst_32 : f32 to vector<2x64xf32>
    %80 = arith.mulf %79, %78 : vector<2x64xf32>
    %81 = math.tanh %80 : vector<2x64xf32>
    %cst_33 = arith.constant 5.000000e-01 : f32
    %82 = vector.broadcast %cst_33 : f32 to vector<2x64xf32>
    %83 = arith.mulf %82, %81 : vector<2x64xf32>
    %cst_34 = arith.constant 5.000000e-01 : f32
    %84 = vector.broadcast %cst_34 : f32 to vector<2x64xf32>
    %85 = arith.addf %83, %84 : vector<2x64xf32>
    %86 = vector.extract_strided_slice %85 {offsets = [0, 0], sizes = [2, 32], strides = [1, 1]} : vector<2x64xf32> to vector<2x32xf32>
    %87 = vector.extract_strided_slice %85 {offsets = [0, 32], sizes = [2, 32], strides = [1, 1]} : vector<2x64xf32> to vector<2x32xf32>
    %88 = vector.extract_strided_slice %75 {offsets = [0, 64], sizes = [2, 32], strides = [1, 1]} : vector<2x96xf32> to vector<2x32xf32>
    %89 = vector.extract_strided_slice %74 {offsets = [0, 64], sizes = [2, 32], strides = [1, 1]} : vector<2x96xf32> to vector<2x32xf32>
    %90 = vector.broadcast %14 : vector<1x32xf32> to vector<2x32xf32>
    %91 = arith.addf %89, %90 : vector<2x32xf32>
    %92 = arith.mulf %86, %91 : vector<2x32xf32>
    %93 = arith.addf %88, %92 : vector<2x32xf32>
    %94 = math.tanh %93 : vector<2x32xf32>
    %95 = arith.subf %45, %94 : vector<2x32xf32>
    %96 = arith.mulf %87, %95 : vector<2x32xf32>
    %97 = arith.addf %94, %96 : vector<2x32xf32>
    %98 = tpu.concatenate %97, %73 in 1 : vector<2x32xf32>, vector<2x32xf32> -> vector<2x64xf32>
    %cst_35 = arith.constant dense<0.000000e+00> : vector<2x128xf32>
    %99 = tpu.matmul %98, %15, %cst_35 {dimension_numbers = #tpu.dot_dimension_numbers<[1], [0], [0], [1], [0, 0, 1, 1], [], []>} : vector<2x64xf32>, vector<64x128xf32>, vector<2x128xf32> -> vector<2x128xf32>
    %100 = vector.extract_strided_slice %99 {offsets = [0, 0], sizes = [2, 64], strides = [1, 1]} : vector<2x128xf32> to vector<2x64xf32>
    %101 = vector.extract_strided_slice %16 {offsets = [0, 0], sizes = [1, 64], strides = [1, 1]} : vector<1x96xf32> to vector<1x64xf32>
    %102 = vector.broadcast %101 : vector<1x64xf32> to vector<2x64xf32>
    %103 = arith.addf %100, %102 : vector<2x64xf32>
    %cst_36 = arith.constant 5.000000e-01 : f32
    %104 = vector.broadcast %cst_36 : f32 to vector<2x64xf32>
    %105 = arith.mulf %104, %103 : vector<2x64xf32>
    %106 = math.tanh %105 : vector<2x64xf32>
    %cst_37 = arith.constant 5.000000e-01 : f32
    %107 = vector.broadcast %cst_37 : f32 to vector<2x64xf32>
    %108 = arith.mulf %107, %106 : vector<2x64xf32>
    %cst_38 = arith.constant 5.000000e-01 : f32
    %109 = vector.broadcast %cst_38 : f32 to vector<2x64xf32>
    %110 = arith.addf %108, %109 : vector<2x64xf32>
    %111 = vector.extract_strided_slice %110 {offsets = [0, 0], sizes = [2, 32], strides = [1, 1]} : vector<2x64xf32> to vector<2x32xf32>
    %112 = vector.extract_strided_slice %110 {offsets = [0, 32], sizes = [2, 32], strides = [1, 1]} : vector<2x64xf32> to vector<2x32xf32>
    %113 = vector.extract_strided_slice %99 {offsets = [0, 64], sizes = [2, 32], strides = [1, 1]} : vector<2x128xf32> to vector<2x32xf32>
    %114 = vector.extract_strided_slice %16 {offsets = [0, 64], sizes = [1, 32], strides = [1, 1]} : vector<1x96xf32> to vector<1x32xf32>
    %115 = vector.broadcast %114 : vector<1x32xf32> to vector<2x32xf32>
    %116 = arith.addf %113, %115 : vector<2x32xf32>
    %117 = vector.extract_strided_slice %99 {offsets = [0, 96], sizes = [2, 32], strides = [1, 1]} : vector<2x128xf32> to vector<2x32xf32>
    %118 = vector.broadcast %17 : vector<1x32xf32> to vector<2x32xf32>
    %119 = arith.addf %117, %118 : vector<2x32xf32>
    %120 = arith.mulf %111, %119 : vector<2x32xf32>
    %121 = arith.addf %116, %120 : vector<2x32xf32>
    %122 = math.tanh %121 : vector<2x32xf32>
    %123 = arith.subf %73, %122 : vector<2x32xf32>
    %124 = arith.mulf %112, %123 : vector<2x32xf32>
    %125 = arith.addf %122, %124 : vector<2x32xf32>
    %cst_39 = arith.constant dense<0.000000e+00> : vector<2x96xf32>
    %126 = tpu.matmul %97, %13, %cst_39 {dimension_numbers = #tpu.dot_dimension_numbers<[1], [0], [0], [1], [0, 0, 1, 1], [], []>} : vector<2x32xf32>, vector<32x96xf32>, vector<2x96xf32> -> vector<2x96xf32>
    %127 = vector.extract_strided_slice %12 {offsets = [4, 0], sizes = [2, 96], strides = [1, 1]} : vector<16x96xf32> to vector<2x96xf32>
    %128 = vector.extract_strided_slice %127 {offsets = [0, 0], sizes = [2, 64], strides = [1, 1]} : vector<2x96xf32> to vector<2x64xf32>
    %129 = vector.extract_strided_slice %126 {offsets = [0, 0], sizes = [2, 64], strides = [1, 1]} : vector<2x96xf32> to vector<2x64xf32>
    %130 = arith.addf %128, %129 : vector<2x64xf32>
    %cst_40 = arith.constant 5.000000e-01 : f32
    %131 = vector.broadcast %cst_40 : f32 to vector<2x64xf32>
    %132 = arith.mulf %131, %130 : vector<2x64xf32>
    %133 = math.tanh %132 : vector<2x64xf32>
    %cst_41 = arith.constant 5.000000e-01 : f32
    %134 = vector.broadcast %cst_41 : f32 to vector<2x64xf32>
    %135 = arith.mulf %134, %133 : vector<2x64xf32>
    %cst_42 = arith.constant 5.000000e-01 : f32
    %136 = vector.broadcast %cst_42 : f32 to vector<2x64xf32>
    %137 = arith.addf %135, %136 : vector<2x64xf32>
    %138 = vector.extract_strided_slice %137 {offsets = [0, 0], sizes = [2, 32], strides = [1, 1]} : vector<2x64xf32> to vector<2x32xf32>
    %139 = vector.extract_strided_slice %137 {offsets = [0, 32], sizes = [2, 32], strides = [1, 1]} : vector<2x64xf32> to vector<2x32xf32>
    %140 = vector.extract_strided_slice %127 {offsets = [0, 64], sizes = [2, 32], strides = [1, 1]} : vector<2x96xf32> to vector<2x32xf32>
    %141 = vector.extract_strided_slice %126 {offsets = [0, 64], sizes = [2, 32], strides = [1, 1]} : vector<2x96xf32> to vector<2x32xf32>
    %142 = vector.broadcast %14 : vector<1x32xf32> to vector<2x32xf32>
    %143 = arith.addf %141, %142 : vector<2x32xf32>
    %144 = arith.mulf %138, %143 : vector<2x32xf32>
    %145 = arith.addf %140, %144 : vector<2x32xf32>
    %146 = math.tanh %145 : vector<2x32xf32>
    %147 = arith.subf %97, %146 : vector<2x32xf32>
    %148 = arith.mulf %139, %147 : vector<2x32xf32>
    %149 = arith.addf %146, %148 : vector<2x32xf32>
    %150 = tpu.concatenate %149, %125 in 1 : vector<2x32xf32>, vector<2x32xf32> -> vector<2x64xf32>
    %cst_43 = arith.constant dense<0.000000e+00> : vector<2x128xf32>
    %151 = tpu.matmul %150, %15, %cst_43 {dimension_numbers = #tpu.dot_dimension_numbers<[1], [0], [0], [1], [0, 0, 1, 1], [], []>} : vector<2x64xf32>, vector<64x128xf32>, vector<2x128xf32> -> vector<2x128xf32>
    %152 = vector.extract_strided_slice %151 {offsets = [0, 0], sizes = [2, 64], strides = [1, 1]} : vector<2x128xf32> to vector<2x64xf32>
    %153 = vector.extract_strided_slice %16 {offsets = [0, 0], sizes = [1, 64], strides = [1, 1]} : vector<1x96xf32> to vector<1x64xf32>
    %154 = vector.broadcast %153 : vector<1x64xf32> to vector<2x64xf32>
    %155 = arith.addf %152, %154 : vector<2x64xf32>
    %cst_44 = arith.constant 5.000000e-01 : f32
    %156 = vector.broadcast %cst_44 : f32 to vector<2x64xf32>
    %157 = arith.mulf %156, %155 : vector<2x64xf32>
    %158 = math.tanh %157 : vector<2x64xf32>
    %cst_45 = arith.constant 5.000000e-01 : f32
    %159 = vector.broadcast %cst_45 : f32 to vector<2x64xf32>
    %160 = arith.mulf %159, %158 : vector<2x64xf32>
    %cst_46 = arith.constant 5.000000e-01 : f32
    %161 = vector.broadcast %cst_46 : f32 to vector<2x64xf32>
    %162 = arith.addf %160, %161 : vector<2x64xf32>
    %163 = vector.extract_strided_slice %162 {offsets = [0, 0], sizes = [2, 32], strides = [1, 1]} : vector<2x64xf32> to vector<2x32xf32>
    %164 = vector.extract_strided_slice %162 {offsets = [0, 32], sizes = [2, 32], strides = [1, 1]} : vector<2x64xf32> to vector<2x32xf32>
    %165 = vector.extract_strided_slice %151 {offsets = [0, 64], sizes = [2, 32], strides = [1, 1]} : vector<2x128xf32> to vector<2x32xf32>
    %166 = vector.extract_strided_slice %16 {offsets = [0, 64], sizes = [1, 32], strides = [1, 1]} : vector<1x96xf32> to vector<1x32xf32>
    %167 = vector.broadcast %166 : vector<1x32xf32> to vector<2x32xf32>
    %168 = arith.addf %165, %167 : vector<2x32xf32>
    %169 = vector.extract_strided_slice %151 {offsets = [0, 96], sizes = [2, 32], strides = [1, 1]} : vector<2x128xf32> to vector<2x32xf32>
    %170 = vector.broadcast %17 : vector<1x32xf32> to vector<2x32xf32>
    %171 = arith.addf %169, %170 : vector<2x32xf32>
    %172 = arith.mulf %163, %171 : vector<2x32xf32>
    %173 = arith.addf %168, %172 : vector<2x32xf32>
    %174 = math.tanh %173 : vector<2x32xf32>
    %175 = arith.subf %125, %174 : vector<2x32xf32>
    %176 = arith.mulf %164, %175 : vector<2x32xf32>
    %177 = arith.addf %174, %176 : vector<2x32xf32>
    %cst_47 = arith.constant dense<0.000000e+00> : vector<2x96xf32>
    %178 = tpu.matmul %149, %13, %cst_47 {dimension_numbers = #tpu.dot_dimension_numbers<[1], [0], [0], [1], [0, 0, 1, 1], [], []>} : vector<2x32xf32>, vector<32x96xf32>, vector<2x96xf32> -> vector<2x96xf32>
    %179 = vector.extract_strided_slice %12 {offsets = [6, 0], sizes = [2, 96], strides = [1, 1]} : vector<16x96xf32> to vector<2x96xf32>
    %180 = vector.extract_strided_slice %179 {offsets = [0, 0], sizes = [2, 64], strides = [1, 1]} : vector<2x96xf32> to vector<2x64xf32>
    %181 = vector.extract_strided_slice %178 {offsets = [0, 0], sizes = [2, 64], strides = [1, 1]} : vector<2x96xf32> to vector<2x64xf32>
    %182 = arith.addf %180, %181 : vector<2x64xf32>
    %cst_48 = arith.constant 5.000000e-01 : f32
    %183 = vector.broadcast %cst_48 : f32 to vector<2x64xf32>
    %184 = arith.mulf %183, %182 : vector<2x64xf32>
    %185 = math.tanh %184 : vector<2x64xf32>
    %cst_49 = arith.constant 5.000000e-01 : f32
    %186 = vector.broadcast %cst_49 : f32 to vector<2x64xf32>
    %187 = arith.mulf %186, %185 : vector<2x64xf32>
    %cst_50 = arith.constant 5.000000e-01 : f32
    %188 = vector.broadcast %cst_50 : f32 to vector<2x64xf32>
    %189 = arith.addf %187, %188 : vector<2x64xf32>
    %190 = vector.extract_strided_slice %189 {offsets = [0, 0], sizes = [2, 32], strides = [1, 1]} : vector<2x64xf32> to vector<2x32xf32>
    %191 = vector.extract_strided_slice %189 {offsets = [0, 32], sizes = [2, 32], strides = [1, 1]} : vector<2x64xf32> to vector<2x32xf32>
    %192 = vector.extract_strided_slice %179 {offsets = [0, 64], sizes = [2, 32], strides = [1, 1]} : vector<2x96xf32> to vector<2x32xf32>
    %193 = vector.extract_strided_slice %178 {offsets = [0, 64], sizes = [2, 32], strides = [1, 1]} : vector<2x96xf32> to vector<2x32xf32>
    %194 = vector.broadcast %14 : vector<1x32xf32> to vector<2x32xf32>
    %195 = arith.addf %193, %194 : vector<2x32xf32>
    %196 = arith.mulf %190, %195 : vector<2x32xf32>
    %197 = arith.addf %192, %196 : vector<2x32xf32>
    %198 = math.tanh %197 : vector<2x32xf32>
    %199 = arith.subf %149, %198 : vector<2x32xf32>
    %200 = arith.mulf %191, %199 : vector<2x32xf32>
    %201 = arith.addf %198, %200 : vector<2x32xf32>
    %202 = tpu.concatenate %201, %177 in 1 : vector<2x32xf32>, vector<2x32xf32> -> vector<2x64xf32>
    %cst_51 = arith.constant dense<0.000000e+00> : vector<2x128xf32>
    %203 = tpu.matmul %202, %15, %cst_51 {dimension_numbers = #tpu.dot_dimension_numbers<[1], [0], [0], [1], [0, 0, 1, 1], [], []>} : vector<2x64xf32>, vector<64x128xf32>, vector<2x128xf32> -> vector<2x128xf32>
    %204 = vector.extract_strided_slice %203 {offsets = [0, 0], sizes = [2, 64], strides = [1, 1]} : vector<2x128xf32> to vector<2x64xf32>
    %205 = vector.extract_strided_slice %16 {offsets = [0, 0], sizes = [1, 64], strides = [1, 1]} : vector<1x96xf32> to vector<1x64xf32>
    %206 = vector.broadcast %205 : vector<1x64xf32> to vector<2x64xf32>
    %207 = arith.addf %204, %206 : vector<2x64xf32>
    %cst_52 = arith.constant 5.000000e-01 : f32
    %208 = vector.broadcast %cst_52 : f32 to vector<2x64xf32>
    %209 = arith.mulf %208, %207 : vector<2x64xf32>
    %210 = math.tanh %209 : vector<2x64xf32>
    %cst_53 = arith.constant 5.000000e-01 : f32
    %211 = vector.broadcast %cst_53 : f32 to vector<2x64xf32>
    %212 = arith.mulf %211, %210 : vector<2x64xf32>
    %cst_54 = arith.constant 5.000000e-01 : f32
    %213 = vector.broadcast %cst_54 : f32 to vector<2x64xf32>
    %214 = arith.addf %212, %213 : vector<2x64xf32>
    %215 = vector.extract_strided_slice %214 {offsets = [0, 0], sizes = [2, 32], strides = [1, 1]} : vector<2x64xf32> to vector<2x32xf32>
    %216 = vector.extract_strided_slice %214 {offsets = [0, 32], sizes = [2, 32], strides = [1, 1]} : vector<2x64xf32> to vector<2x32xf32>
    %217 = vector.extract_strided_slice %203 {offsets = [0, 64], sizes = [2, 32], strides = [1, 1]} : vector<2x128xf32> to vector<2x32xf32>
    %218 = vector.extract_strided_slice %16 {offsets = [0, 64], sizes = [1, 32], strides = [1, 1]} : vector<1x96xf32> to vector<1x32xf32>
    %219 = vector.broadcast %218 : vector<1x32xf32> to vector<2x32xf32>
    %220 = arith.addf %217, %219 : vector<2x32xf32>
    %221 = vector.extract_strided_slice %203 {offsets = [0, 96], sizes = [2, 32], strides = [1, 1]} : vector<2x128xf32> to vector<2x32xf32>
    %222 = vector.broadcast %17 : vector<1x32xf32> to vector<2x32xf32>
    %223 = arith.addf %221, %222 : vector<2x32xf32>
    %224 = arith.mulf %215, %223 : vector<2x32xf32>
    %225 = arith.addf %220, %224 : vector<2x32xf32>
    %226 = math.tanh %225 : vector<2x32xf32>
    %227 = arith.subf %177, %226 : vector<2x32xf32>
    %228 = arith.mulf %216, %227 : vector<2x32xf32>
    %229 = arith.addf %226, %228 : vector<2x32xf32>
    %cst_55 = arith.constant dense<0.000000e+00> : vector<2x96xf32>
    %230 = tpu.matmul %201, %13, %cst_55 {dimension_numbers = #tpu.dot_dimension_numbers<[1], [0], [0], [1], [0, 0, 1, 1], [], []>} : vector<2x32xf32>, vector<32x96xf32>, vector<2x96xf32> -> vector<2x96xf32>
    %231 = vector.extract_strided_slice %12 {offsets = [8, 0], sizes = [2, 96], strides = [1, 1]} : vector<16x96xf32> to vector<2x96xf32>
    %232 = vector.extract_strided_slice %231 {offsets = [0, 0], sizes = [2, 64], strides = [1, 1]} : vector<2x96xf32> to vector<2x64xf32>
    %233 = vector.extract_strided_slice %230 {offsets = [0, 0], sizes = [2, 64], strides = [1, 1]} : vector<2x96xf32> to vector<2x64xf32>
    %234 = arith.addf %232, %233 : vector<2x64xf32>
    %cst_56 = arith.constant 5.000000e-01 : f32
    %235 = vector.broadcast %cst_56 : f32 to vector<2x64xf32>
    %236 = arith.mulf %235, %234 : vector<2x64xf32>
    %237 = math.tanh %236 : vector<2x64xf32>
    %cst_57 = arith.constant 5.000000e-01 : f32
    %238 = vector.broadcast %cst_57 : f32 to vector<2x64xf32>
    %239 = arith.mulf %238, %237 : vector<2x64xf32>
    %cst_58 = arith.constant 5.000000e-01 : f32
    %240 = vector.broadcast %cst_58 : f32 to vector<2x64xf32>
    %241 = arith.addf %239, %240 : vector<2x64xf32>
    %242 = vector.extract_strided_slice %241 {offsets = [0, 0], sizes = [2, 32], strides = [1, 1]} : vector<2x64xf32> to vector<2x32xf32>
    %243 = vector.extract_strided_slice %241 {offsets = [0, 32], sizes = [2, 32], strides = [1, 1]} : vector<2x64xf32> to vector<2x32xf32>
    %244 = vector.extract_strided_slice %231 {offsets = [0, 64], sizes = [2, 32], strides = [1, 1]} : vector<2x96xf32> to vector<2x32xf32>
    %245 = vector.extract_strided_slice %230 {offsets = [0, 64], sizes = [2, 32], strides = [1, 1]} : vector<2x96xf32> to vector<2x32xf32>
    %246 = vector.broadcast %14 : vector<1x32xf32> to vector<2x32xf32>
    %247 = arith.addf %245, %246 : vector<2x32xf32>
    %248 = arith.mulf %242, %247 : vector<2x32xf32>
    %249 = arith.addf %244, %248 : vector<2x32xf32>
    %250 = math.tanh %249 : vector<2x32xf32>
    %251 = arith.subf %201, %250 : vector<2x32xf32>
    %252 = arith.mulf %243, %251 : vector<2x32xf32>
    %253 = arith.addf %250, %252 : vector<2x32xf32>
    %254 = tpu.concatenate %253, %229 in 1 : vector<2x32xf32>, vector<2x32xf32> -> vector<2x64xf32>
    %cst_59 = arith.constant dense<0.000000e+00> : vector<2x128xf32>
    %255 = tpu.matmul %254, %15, %cst_59 {dimension_numbers = #tpu.dot_dimension_numbers<[1], [0], [0], [1], [0, 0, 1, 1], [], []>} : vector<2x64xf32>, vector<64x128xf32>, vector<2x128xf32> -> vector<2x128xf32>
    %256 = vector.extract_strided_slice %255 {offsets = [0, 0], sizes = [2, 64], strides = [1, 1]} : vector<2x128xf32> to vector<2x64xf32>
    %257 = vector.extract_strided_slice %16 {offsets = [0, 0], sizes = [1, 64], strides = [1, 1]} : vector<1x96xf32> to vector<1x64xf32>
    %258 = vector.broadcast %257 : vector<1x64xf32> to vector<2x64xf32>
    %259 = arith.addf %256, %258 : vector<2x64xf32>
    %cst_60 = arith.constant 5.000000e-01 : f32
    %260 = vector.broadcast %cst_60 : f32 to vector<2x64xf32>
    %261 = arith.mulf %260, %259 : vector<2x64xf32>
    %262 = math.tanh %261 : vector<2x64xf32>
    %cst_61 = arith.constant 5.000000e-01 : f32
    %263 = vector.broadcast %cst_61 : f32 to vector<2x64xf32>
    %264 = arith.mulf %263, %262 : vector<2x64xf32>
    %cst_62 = arith.constant 5.000000e-01 : f32
    %265 = vector.broadcast %cst_62 : f32 to vector<2x64xf32>
    %266 = arith.addf %264, %265 : vector<2x64xf32>
    %267 = vector.extract_strided_slice %266 {offsets = [0, 0], sizes = [2, 32], strides = [1, 1]} : vector<2x64xf32> to vector<2x32xf32>
    %268 = vector.extract_strided_slice %266 {offsets = [0, 32], sizes = [2, 32], strides = [1, 1]} : vector<2x64xf32> to vector<2x32xf32>
    %269 = vector.extract_strided_slice %255 {offsets = [0, 64], sizes = [2, 32], strides = [1, 1]} : vector<2x128xf32> to vector<2x32xf32>
    %270 = vector.extract_strided_slice %16 {offsets = [0, 64], sizes = [1, 32], strides = [1, 1]} : vector<1x96xf32> to vector<1x32xf32>
    %271 = vector.broadcast %270 : vector<1x32xf32> to vector<2x32xf32>
    %272 = arith.addf %269, %271 : vector<2x32xf32>
    %273 = vector.extract_strided_slice %255 {offsets = [0, 96], sizes = [2, 32], strides = [1, 1]} : vector<2x128xf32> to vector<2x32xf32>
    %274 = vector.broadcast %17 : vector<1x32xf32> to vector<2x32xf32>
    %275 = arith.addf %273, %274 : vector<2x32xf32>
    %276 = arith.mulf %267, %275 : vector<2x32xf32>
    %277 = arith.addf %272, %276 : vector<2x32xf32>
    %278 = math.tanh %277 : vector<2x32xf32>
    %279 = arith.subf %229, %278 : vector<2x32xf32>
    %280 = arith.mulf %268, %279 : vector<2x32xf32>
    %281 = arith.addf %278, %280 : vector<2x32xf32>
    %cst_63 = arith.constant dense<0.000000e+00> : vector<2x96xf32>
    %282 = tpu.matmul %253, %13, %cst_63 {dimension_numbers = #tpu.dot_dimension_numbers<[1], [0], [0], [1], [0, 0, 1, 1], [], []>} : vector<2x32xf32>, vector<32x96xf32>, vector<2x96xf32> -> vector<2x96xf32>
    %283 = vector.extract_strided_slice %12 {offsets = [10, 0], sizes = [2, 96], strides = [1, 1]} : vector<16x96xf32> to vector<2x96xf32>
    %284 = vector.extract_strided_slice %283 {offsets = [0, 0], sizes = [2, 64], strides = [1, 1]} : vector<2x96xf32> to vector<2x64xf32>
    %285 = vector.extract_strided_slice %282 {offsets = [0, 0], sizes = [2, 64], strides = [1, 1]} : vector<2x96xf32> to vector<2x64xf32>
    %286 = arith.addf %284, %285 : vector<2x64xf32>
    %cst_64 = arith.constant 5.000000e-01 : f32
    %287 = vector.broadcast %cst_64 : f32 to vector<2x64xf32>
    %288 = arith.mulf %287, %286 : vector<2x64xf32>
    %289 = math.tanh %288 : vector<2x64xf32>
    %cst_65 = arith.constant 5.000000e-01 : f32
    %290 = vector.broadcast %cst_65 : f32 to vector<2x64xf32>
    %291 = arith.mulf %290, %289 : vector<2x64xf32>
    %cst_66 = arith.constant 5.000000e-01 : f32
    %292 = vector.broadcast %cst_66 : f32 to vector<2x64xf32>
    %293 = arith.addf %291, %292 : vector<2x64xf32>
    %294 = vector.extract_strided_slice %293 {offsets = [0, 0], sizes = [2, 32], strides = [1, 1]} : vector<2x64xf32> to vector<2x32xf32>
    %295 = vector.extract_strided_slice %293 {offsets = [0, 32], sizes = [2, 32], strides = [1, 1]} : vector<2x64xf32> to vector<2x32xf32>
    %296 = vector.extract_strided_slice %283 {offsets = [0, 64], sizes = [2, 32], strides = [1, 1]} : vector<2x96xf32> to vector<2x32xf32>
    %297 = vector.extract_strided_slice %282 {offsets = [0, 64], sizes = [2, 32], strides = [1, 1]} : vector<2x96xf32> to vector<2x32xf32>
    %298 = vector.broadcast %14 : vector<1x32xf32> to vector<2x32xf32>
    %299 = arith.addf %297, %298 : vector<2x32xf32>
    %300 = arith.mulf %294, %299 : vector<2x32xf32>
    %301 = arith.addf %296, %300 : vector<2x32xf32>
    %302 = math.tanh %301 : vector<2x32xf32>
    %303 = arith.subf %253, %302 : vector<2x32xf32>
    %304 = arith.mulf %295, %303 : vector<2x32xf32>
    %305 = arith.addf %302, %304 : vector<2x32xf32>
    %306 = tpu.concatenate %305, %281 in 1 : vector<2x32xf32>, vector<2x32xf32> -> vector<2x64xf32>
    %cst_67 = arith.constant dense<0.000000e+00> : vector<2x128xf32>
    %307 = tpu.matmul %306, %15, %cst_67 {dimension_numbers = #tpu.dot_dimension_numbers<[1], [0], [0], [1], [0, 0, 1, 1], [], []>} : vector<2x64xf32>, vector<64x128xf32>, vector<2x128xf32> -> vector<2x128xf32>
    %308 = vector.extract_strided_slice %307 {offsets = [0, 0], sizes = [2, 64], strides = [1, 1]} : vector<2x128xf32> to vector<2x64xf32>
    %309 = vector.extract_strided_slice %16 {offsets = [0, 0], sizes = [1, 64], strides = [1, 1]} : vector<1x96xf32> to vector<1x64xf32>
    %310 = vector.broadcast %309 : vector<1x64xf32> to vector<2x64xf32>
    %311 = arith.addf %308, %310 : vector<2x64xf32>
    %cst_68 = arith.constant 5.000000e-01 : f32
    %312 = vector.broadcast %cst_68 : f32 to vector<2x64xf32>
    %313 = arith.mulf %312, %311 : vector<2x64xf32>
    %314 = math.tanh %313 : vector<2x64xf32>
    %cst_69 = arith.constant 5.000000e-01 : f32
    %315 = vector.broadcast %cst_69 : f32 to vector<2x64xf32>
    %316 = arith.mulf %315, %314 : vector<2x64xf32>
    %cst_70 = arith.constant 5.000000e-01 : f32
    %317 = vector.broadcast %cst_70 : f32 to vector<2x64xf32>
    %318 = arith.addf %316, %317 : vector<2x64xf32>
    %319 = vector.extract_strided_slice %318 {offsets = [0, 0], sizes = [2, 32], strides = [1, 1]} : vector<2x64xf32> to vector<2x32xf32>
    %320 = vector.extract_strided_slice %318 {offsets = [0, 32], sizes = [2, 32], strides = [1, 1]} : vector<2x64xf32> to vector<2x32xf32>
    %321 = vector.extract_strided_slice %307 {offsets = [0, 64], sizes = [2, 32], strides = [1, 1]} : vector<2x128xf32> to vector<2x32xf32>
    %322 = vector.extract_strided_slice %16 {offsets = [0, 64], sizes = [1, 32], strides = [1, 1]} : vector<1x96xf32> to vector<1x32xf32>
    %323 = vector.broadcast %322 : vector<1x32xf32> to vector<2x32xf32>
    %324 = arith.addf %321, %323 : vector<2x32xf32>
    %325 = vector.extract_strided_slice %307 {offsets = [0, 96], sizes = [2, 32], strides = [1, 1]} : vector<2x128xf32> to vector<2x32xf32>
    %326 = vector.broadcast %17 : vector<1x32xf32> to vector<2x32xf32>
    %327 = arith.addf %325, %326 : vector<2x32xf32>
    %328 = arith.mulf %319, %327 : vector<2x32xf32>
    %329 = arith.addf %324, %328 : vector<2x32xf32>
    %330 = math.tanh %329 : vector<2x32xf32>
    %331 = arith.subf %281, %330 : vector<2x32xf32>
    %332 = arith.mulf %320, %331 : vector<2x32xf32>
    %333 = arith.addf %330, %332 : vector<2x32xf32>
    %cst_71 = arith.constant dense<0.000000e+00> : vector<2x96xf32>
    %334 = tpu.matmul %305, %13, %cst_71 {dimension_numbers = #tpu.dot_dimension_numbers<[1], [0], [0], [1], [0, 0, 1, 1], [], []>} : vector<2x32xf32>, vector<32x96xf32>, vector<2x96xf32> -> vector<2x96xf32>
    %335 = vector.extract_strided_slice %12 {offsets = [12, 0], sizes = [2, 96], strides = [1, 1]} : vector<16x96xf32> to vector<2x96xf32>
    %336 = vector.extract_strided_slice %335 {offsets = [0, 0], sizes = [2, 64], strides = [1, 1]} : vector<2x96xf32> to vector<2x64xf32>
    %337 = vector.extract_strided_slice %334 {offsets = [0, 0], sizes = [2, 64], strides = [1, 1]} : vector<2x96xf32> to vector<2x64xf32>
    %338 = arith.addf %336, %337 : vector<2x64xf32>
    %cst_72 = arith.constant 5.000000e-01 : f32
    %339 = vector.broadcast %cst_72 : f32 to vector<2x64xf32>
    %340 = arith.mulf %339, %338 : vector<2x64xf32>
    %341 = math.tanh %340 : vector<2x64xf32>
    %cst_73 = arith.constant 5.000000e-01 : f32
    %342 = vector.broadcast %cst_73 : f32 to vector<2x64xf32>
    %343 = arith.mulf %342, %341 : vector<2x64xf32>
    %cst_74 = arith.constant 5.000000e-01 : f32
    %344 = vector.broadcast %cst_74 : f32 to vector<2x64xf32>
    %345 = arith.addf %343, %344 : vector<2x64xf32>
    %346 = vector.extract_strided_slice %345 {offsets = [0, 0], sizes = [2, 32], strides = [1, 1]} : vector<2x64xf32> to vector<2x32xf32>
    %347 = vector.extract_strided_slice %345 {offsets = [0, 32], sizes = [2, 32], strides = [1, 1]} : vector<2x64xf32> to vector<2x32xf32>
    %348 = vector.extract_strided_slice %335 {offsets = [0, 64], sizes = [2, 32], strides = [1, 1]} : vector<2x96xf32> to vector<2x32xf32>
    %349 = vector.extract_strided_slice %334 {offsets = [0, 64], sizes = [2, 32], strides = [1, 1]} : vector<2x96xf32> to vector<2x32xf32>
    %350 = vector.broadcast %14 : vector<1x32xf32> to vector<2x32xf32>
    %351 = arith.addf %349, %350 : vector<2x32xf32>
    %352 = arith.mulf %346, %351 : vector<2x32xf32>
    %353 = arith.addf %348, %352 : vector<2x32xf32>
    %354 = math.tanh %353 : vector<2x32xf32>
    %355 = arith.subf %305, %354 : vector<2x32xf32>
    %356 = arith.mulf %347, %355 : vector<2x32xf32>
    %357 = arith.addf %354, %356 : vector<2x32xf32>
    %358 = tpu.concatenate %357, %333 in 1 : vector<2x32xf32>, vector<2x32xf32> -> vector<2x64xf32>
    %cst_75 = arith.constant dense<0.000000e+00> : vector<2x128xf32>
    %359 = tpu.matmul %358, %15, %cst_75 {dimension_numbers = #tpu.dot_dimension_numbers<[1], [0], [0], [1], [0, 0, 1, 1], [], []>} : vector<2x64xf32>, vector<64x128xf32>, vector<2x128xf32> -> vector<2x128xf32>
    %360 = vector.extract_strided_slice %359 {offsets = [0, 0], sizes = [2, 64], strides = [1, 1]} : vector<2x128xf32> to vector<2x64xf32>
    %361 = vector.extract_strided_slice %16 {offsets = [0, 0], sizes = [1, 64], strides = [1, 1]} : vector<1x96xf32> to vector<1x64xf32>
    %362 = vector.broadcast %361 : vector<1x64xf32> to vector<2x64xf32>
    %363 = arith.addf %360, %362 : vector<2x64xf32>
    %cst_76 = arith.constant 5.000000e-01 : f32
    %364 = vector.broadcast %cst_76 : f32 to vector<2x64xf32>
    %365 = arith.mulf %364, %363 : vector<2x64xf32>
    %366 = math.tanh %365 : vector<2x64xf32>
    %cst_77 = arith.constant 5.000000e-01 : f32
    %367 = vector.broadcast %cst_77 : f32 to vector<2x64xf32>
    %368 = arith.mulf %367, %366 : vector<2x64xf32>
    %cst_78 = arith.constant 5.000000e-01 : f32
    %369 = vector.broadcast %cst_78 : f32 to vector<2x64xf32>
    %370 = arith.addf %368, %369 : vector<2x64xf32>
    %371 = vector.extract_strided_slice %370 {offsets = [0, 0], sizes = [2, 32], strides = [1, 1]} : vector<2x64xf32> to vector<2x32xf32>
    %372 = vector.extract_strided_slice %370 {offsets = [0, 32], sizes = [2, 32], strides = [1, 1]} : vector<2x64xf32> to vector<2x32xf32>
    %373 = vector.extract_strided_slice %359 {offsets = [0, 64], sizes = [2, 32], strides = [1, 1]} : vector<2x128xf32> to vector<2x32xf32>
    %374 = vector.extract_strided_slice %16 {offsets = [0, 64], sizes = [1, 32], strides = [1, 1]} : vector<1x96xf32> to vector<1x32xf32>
    %375 = vector.broadcast %374 : vector<1x32xf32> to vector<2x32xf32>
    %376 = arith.addf %373, %375 : vector<2x32xf32>
    %377 = vector.extract_strided_slice %359 {offsets = [0, 96], sizes = [2, 32], strides = [1, 1]} : vector<2x128xf32> to vector<2x32xf32>
    %378 = vector.broadcast %17 : vector<1x32xf32> to vector<2x32xf32>
    %379 = arith.addf %377, %378 : vector<2x32xf32>
    %380 = arith.mulf %371, %379 : vector<2x32xf32>
    %381 = arith.addf %376, %380 : vector<2x32xf32>
    %382 = math.tanh %381 : vector<2x32xf32>
    %383 = arith.subf %333, %382 : vector<2x32xf32>
    %384 = arith.mulf %372, %383 : vector<2x32xf32>
    %385 = arith.addf %382, %384 : vector<2x32xf32>
    %cst_79 = arith.constant dense<0.000000e+00> : vector<2x96xf32>
    %386 = tpu.matmul %357, %13, %cst_79 {dimension_numbers = #tpu.dot_dimension_numbers<[1], [0], [0], [1], [0, 0, 1, 1], [], []>} : vector<2x32xf32>, vector<32x96xf32>, vector<2x96xf32> -> vector<2x96xf32>
    %387 = vector.extract_strided_slice %12 {offsets = [14, 0], sizes = [2, 96], strides = [1, 1]} : vector<16x96xf32> to vector<2x96xf32>
    %388 = vector.extract_strided_slice %387 {offsets = [0, 0], sizes = [2, 64], strides = [1, 1]} : vector<2x96xf32> to vector<2x64xf32>
    %389 = vector.extract_strided_slice %386 {offsets = [0, 0], sizes = [2, 64], strides = [1, 1]} : vector<2x96xf32> to vector<2x64xf32>
    %390 = arith.addf %388, %389 : vector<2x64xf32>
    %cst_80 = arith.constant 5.000000e-01 : f32
    %391 = vector.broadcast %cst_80 : f32 to vector<2x64xf32>
    %392 = arith.mulf %391, %390 : vector<2x64xf32>
    %393 = math.tanh %392 : vector<2x64xf32>
    %cst_81 = arith.constant 5.000000e-01 : f32
    %394 = vector.broadcast %cst_81 : f32 to vector<2x64xf32>
    %395 = arith.mulf %394, %393 : vector<2x64xf32>
    %cst_82 = arith.constant 5.000000e-01 : f32
    %396 = vector.broadcast %cst_82 : f32 to vector<2x64xf32>
    %397 = arith.addf %395, %396 : vector<2x64xf32>
    %398 = vector.extract_strided_slice %397 {offsets = [0, 0], sizes = [2, 32], strides = [1, 1]} : vector<2x64xf32> to vector<2x32xf32>
    %399 = vector.extract_strided_slice %397 {offsets = [0, 32], sizes = [2, 32], strides = [1, 1]} : vector<2x64xf32> to vector<2x32xf32>
    %400 = vector.extract_strided_slice %387 {offsets = [0, 64], sizes = [2, 32], strides = [1, 1]} : vector<2x96xf32> to vector<2x32xf32>
    %401 = vector.extract_strided_slice %386 {offsets = [0, 64], sizes = [2, 32], strides = [1, 1]} : vector<2x96xf32> to vector<2x32xf32>
    %402 = vector.broadcast %14 : vector<1x32xf32> to vector<2x32xf32>
    %403 = arith.addf %401, %402 : vector<2x32xf32>
    %404 = arith.mulf %398, %403 : vector<2x32xf32>
    %405 = arith.addf %400, %404 : vector<2x32xf32>
    %406 = math.tanh %405 : vector<2x32xf32>
    %407 = arith.subf %357, %406 : vector<2x32xf32>
    %408 = arith.mulf %399, %407 : vector<2x32xf32>
    %409 = arith.addf %406, %408 : vector<2x32xf32>
    %410 = tpu.concatenate %409, %385 in 1 : vector<2x32xf32>, vector<2x32xf32> -> vector<2x64xf32>
    %cst_83 = arith.constant dense<0.000000e+00> : vector<2x128xf32>
    %411 = tpu.matmul %410, %15, %cst_83 {dimension_numbers = #tpu.dot_dimension_numbers<[1], [0], [0], [1], [0, 0, 1, 1], [], []>} : vector<2x64xf32>, vector<64x128xf32>, vector<2x128xf32> -> vector<2x128xf32>
    %412 = vector.extract_strided_slice %411 {offsets = [0, 0], sizes = [2, 64], strides = [1, 1]} : vector<2x128xf32> to vector<2x64xf32>
    %413 = vector.extract_strided_slice %16 {offsets = [0, 0], sizes = [1, 64], strides = [1, 1]} : vector<1x96xf32> to vector<1x64xf32>
    %414 = vector.broadcast %413 : vector<1x64xf32> to vector<2x64xf32>
    %415 = arith.addf %412, %414 : vector<2x64xf32>
    %cst_84 = arith.constant 5.000000e-01 : f32
    %416 = vector.broadcast %cst_84 : f32 to vector<2x64xf32>
    %417 = arith.mulf %416, %415 : vector<2x64xf32>
    %418 = math.tanh %417 : vector<2x64xf32>
    %cst_85 = arith.constant 5.000000e-01 : f32
    %419 = vector.broadcast %cst_85 : f32 to vector<2x64xf32>
    %420 = arith.mulf %419, %418 : vector<2x64xf32>
    %cst_86 = arith.constant 5.000000e-01 : f32
    %421 = vector.broadcast %cst_86 : f32 to vector<2x64xf32>
    %422 = arith.addf %420, %421 : vector<2x64xf32>
    %423 = vector.extract_strided_slice %422 {offsets = [0, 0], sizes = [2, 32], strides = [1, 1]} : vector<2x64xf32> to vector<2x32xf32>
    %424 = vector.extract_strided_slice %422 {offsets = [0, 32], sizes = [2, 32], strides = [1, 1]} : vector<2x64xf32> to vector<2x32xf32>
    %425 = vector.extract_strided_slice %411 {offsets = [0, 64], sizes = [2, 32], strides = [1, 1]} : vector<2x128xf32> to vector<2x32xf32>
    %426 = vector.extract_strided_slice %16 {offsets = [0, 64], sizes = [1, 32], strides = [1, 1]} : vector<1x96xf32> to vector<1x32xf32>
    %427 = vector.broadcast %426 : vector<1x32xf32> to vector<2x32xf32>
    %428 = arith.addf %425, %427 : vector<2x32xf32>
    %429 = vector.extract_strided_slice %411 {offsets = [0, 96], sizes = [2, 32], strides = [1, 1]} : vector<2x128xf32> to vector<2x32xf32>
    %430 = vector.broadcast %17 : vector<1x32xf32> to vector<2x32xf32>
    %431 = arith.addf %429, %430 : vector<2x32xf32>
    %432 = arith.mulf %423, %431 : vector<2x32xf32>
    %433 = arith.addf %428, %432 : vector<2x32xf32>
    %434 = math.tanh %433 : vector<2x32xf32>
    %435 = arith.subf %385, %434 : vector<2x32xf32>
    %436 = arith.mulf %424, %435 : vector<2x32xf32>
    %437 = arith.addf %434, %436 : vector<2x32xf32>
    %c0_87 = arith.constant 0 : index
    %c0_88 = arith.constant 0 : index
    %c0_89 = arith.constant 0 : index
    %438 = vector.load %arg15[%c0_87, %c0_88, %c0_89] : memref<2x2x32xf32, #tpu.memory_space<vmem>>, vector<1x2x32xf32>
    %439 = vector.shape_cast %438 : vector<1x2x32xf32> to vector<2x32xf32>
    %440 = vector.shape_cast %409 : vector<2x32xf32> to vector<1x2x32xf32>
    tpu.vector_store %arg15[%c0_87, %c0_88, %c0_89], %440 {strides = array<i32>} : memref<2x2x32xf32, #tpu.memory_space<vmem>>, vector<1x2x32xf32>,
    %c1_90 = arith.constant 1 : index
    %c0_91 = arith.constant 0 : index
    %c0_92 = arith.constant 0 : index
    %441 = vector.load %arg15[%c1_90, %c0_91, %c0_92] : memref<2x2x32xf32, #tpu.memory_space<vmem>>, vector<1x2x32xf32>
    %442 = vector.shape_cast %441 : vector<1x2x32xf32> to vector<2x32xf32>
    %443 = vector.shape_cast %437 : vector<2x32xf32> to vector<1x2x32xf32>
    tpu.vector_store %arg15[%c1_90, %c0_91, %c0_92], %443 {strides = array<i32>} : memref<2x2x32xf32, #tpu.memory_space<vmem>>, vector<1x2x32xf32>,
    %444 = tpu.concatenate %73, %125, %177, %229, %281, %333, %385, %437 in 0 : vector<2x32xf32>, vector<2x32xf32>, vector<2x32xf32>, vector<2x32xf32>, vector<2x32xf32>, vector<2x32xf32>, vector<2x32xf32>, vector<2x32xf32> -> vector<16x32xf32>
    %c0_93 = arith.constant 0 : index
    %c0_94 = arith.constant 0 : index
    %445 = vector.load %arg10[%c0_93, %c0_94] : memref<32x32xf32, #tpu.memory_space<vmem>>, vector<32x32xf32>
    %cst_95 = arith.constant dense<0.000000e+00> : vector<16x32xf32>
    %446 = tpu.matmul %444, %445, %cst_95 {dimension_numbers = #tpu.dot_dimension_numbers<[1], [0], [0], [1], [0, 0, 1, 1], [], []>} : vector<16x32xf32>, vector<32x32xf32>, vector<16x32xf32> -> vector<16x32xf32>
    %c0_96 = arith.constant 0 : index
    %c0_97 = arith.constant 0 : index
    %447 = vector.load %arg11[%c0_96, %c0_97] : memref<1x32xf32, #tpu.memory_space<vmem>>, vector<1x32xf32>
    %448 = vector.broadcast %447 : vector<1x32xf32> to vector<16x32xf32>
    %449 = arith.addf %446, %448 : vector<16x32xf32>
    %cst_98 = arith.constant 0.000000e+00 : f32
    %450 = vector.broadcast %cst_98 : f32 to vector<16x32xf32>
    %451 = arith.maximumf %449, %450 : vector<16x32xf32>
    %c0_99 = arith.constant 0 : index
    %c0_100 = arith.constant 0 : index
    %452 = vector.load %arg12[%c0_99, %c0_100] : memref<32x16xf32, #tpu.memory_space<vmem>>, vector<32x16xf32>
    %cst_101 = arith.constant dense<0.000000e+00> : vector<16x16xf32>
    %453 = tpu.matmul %451, %452, %cst_101 {dimension_numbers = #tpu.dot_dimension_numbers<[1], [0], [0], [1], [0, 0, 1, 1], [], []>} : vector<16x32xf32>, vector<32x16xf32>, vector<16x16xf32> -> vector<16x16xf32>
    %c0_102 = arith.constant 0 : index
    %c0_103 = arith.constant 0 : index
    %454 = vector.load %arg13[%c0_102, %c0_103] : memref<1x16xf32, #tpu.memory_space<vmem>>, vector<1x16xf32>
    %455 = vector.broadcast %454 : vector<1x16xf32> to vector<16x16xf32>
    %456 = arith.addf %453, %455 : vector<16x16xf32>
    %c0_104 = arith.constant 0 : index
    %c0_105 = arith.constant 0 : index
    %457 = vector.load %arg14[%c0_104, %c0_105] : memref<16x16xf32, #tpu.memory_space<vmem>>, vector<16x16xf32>
    tpu.vector_store %arg14[%c0_104, %c0_105], %456 {strides = array<i32>} : memref<16x16xf32, #tpu.memory_space<vmem>>, vector<16x16xf32>,
    return
  }
}

</mosaic_0001>

<llo_original>
// kernel: char_rnn_forward.1
$region0: #{char_rnn_forward.1}
  #allocation0 [shape = 'u32[]', space=smem, size = 0x4, offset = 0x4, fixed_abs, tag = 'smem constant byte address 0x4 - core index']
  #allocation1 [shape = 'u32[72,128]{1,0:T(1,128)}', space=vmem, size = 0x9000, scoped, tag = 'internal scratch']
  %s0 = inlined_call_operand.vmem [shape: s32[16,1], index: 0, kind: input, shape index: {}]
  %s1 = inlined_call_operand.hbm [shape: f32[16,16], index: 1, kind: input, shape index: {}]
  %s2 = inlined_call_operand.vmem [shape: f32[2,2,32], index: 2, kind: input, shape index: {}]
  %s3 = inlined_call_operand.hbm [shape: f32[16,96], index: 3, kind: input, shape index: {}]
  %s4 = inlined_call_operand.hbm [shape: f32[32,96], index: 4, kind: input, shape index: {}]
  %s5 = inlined_call_operand.vmem [shape: f32[1,96], index: 5, kind: input, shape index: {}]
  %s6 = inlined_call_operand.vmem [shape: f32[1,32], index: 6, kind: input, shape index: {}]
  %s7 = inlined_call_operand.vmem [shape: f32[64,128], index: 7, kind: input, shape index: {}]
  %s8 = inlined_call_operand.vmem [shape: f32[1,96], index: 8, kind: input, shape index: {}]
  %s9 = inlined_call_operand.vmem [shape: f32[1,32], index: 9, kind: input, shape index: {}]
  %s10 = inlined_call_operand.hbm [shape: f32[32,32], index: 10, kind: input, shape index: {}]
  %s11 = inlined_call_operand.hbm [shape: f32[1,32], index: 11, kind: input, shape index: {}]
  %s12 = inlined_call_operand.vmem [shape: f32[32,16], index: 12, kind: input, shape index: {}]
  %s13 = inlined_call_operand.hbm [shape: f32[1,16], index: 13, kind: input, shape index: {}]
  %s14 = inlined_call_operand.vmem [shape: f32[16,16], index: 14, kind: output, shape index: {0}]
  %s15 = inlined_call_operand.hbm [shape: f32[2,2,32], index: 15, kind: output, shape index: {1}]
  %16 = xla_tuple %s14, %s15
  %s17 = sld [smem:[#allocation0]]
  $region98: #{char_rnn_forward.1} parent=0
    _
  %s19 = ssub.s32 1, %s17
  %s20 = scalar_select 0, %s19, %s17
  $region1: #{char_rnn_forward.1} parent=0
    #allocation2 [shape = 'u8[8192]{0}', space=vmem, size = 0x2000, scoped, tag = 'input window, operand 1, single buffered']
    #allocation3 [shape = 's32[1]{0}', space=sflag, size = 0x4, scoped, tag = 'scoped memory for char_rnn_forward.1']
    #allocation4 [shape = 's32[1]{0}', space=sflag, size = 0x4, scoped, tag = 'scoped memory for char_rnn_forward.1']
    #allocation5 [shape = 'u8[8192]{0}', space=vmem, size = 0x2000, scoped, tag = 'input window, operand 3, single buffered']
    #allocation6 [shape = 's32[1]{0}', space=sflag, size = 0x4, scoped, tag = 'scoped memory for char_rnn_forward.1']
    #allocation7 [shape = 'u8[16384]{0}', space=vmem, size = 0x4000, scoped, tag = 'input window, operand 4, single buffered']
    #allocation8 [shape = 'u8[16384]{0}', space=vmem, size = 0x4000, scoped, tag = 'input window, operand 10, single buffered']
    #allocation9 [shape = 's32[1]{0}', space=sflag, size = 0x4, scoped, tag = 'scoped memory for char_rnn_forward.1']
    #allocation10 [shape = 'u8[512]{0}', space=vmem, size = 0x400, scoped, tag = 'input window, operand 11, single buffered']
    #allocation11 [shape = 'u8[512]{0}', space=vmem, size = 0x400, scoped, tag = 'input window, operand 13, single buffered']
    #allocation12 [shape = 's32[1]{0}', space=sflag, size = 0x4, scoped, tag = 'scoped memory for char_rnn_forward.1']
    #allocation13 [shape = 'u8[2048]{0}', space=vmem, size = 0x800, scoped, tag = 'output window, operand 1, single buffered']
    %21 = vsyncpa [#allocation3], 0
    %22 = vsyncpa [#allocation6], 0
    %23 = vsyncpa [#allocation9], 0
    %24 = vsyncpa [#allocation12], 0
    %25 = vsyncpa [#allocation4], 0
    // Predicated region
    $region2: #{char_rnn_forward.1} parent=1 // pred_check
      _
    $region3: #{char_rnn_forward.1} parent=1 // pred_check_branch
      %27 = sbr.rel (0) target = $region5
    $region4: #{char_rnn_forward.1} parent=1 // pred_region
      _
    $region5: #{char_rnn_forward.1} parent=1 // pred_fallthru
      _
    // Predicated region
    $region6: #{char_rnn_forward.1} parent=1 // pred_check
      _
    $region7: #{char_rnn_forward.1} parent=1 // pred_check_branch
      %29 = sbr.rel (0) target = $region9
    $region8: #{char_rnn_forward.1} parent=1 // pred_region
      %31 = vsyncadd [#allocation3], 0
      %s32 = sshll.u32 %s1, 4
      %s33 = int_to_ptr.hbm [resolvable:$true] %s32
      %s34 = sshll.u32 [#allocation2], 4
      %s35 = int_to_ptr.vmem [resolvable:$true] %s34
      %40 = dma.hbm_to_vmem [thread:$0]  %s33, 256, %s35, [#allocation3], 128, 128, 8
    $region9: #{char_rnn_forward.1} parent=1 // pred_fallthru
      _
    // Predicated region
    $region10: #{char_rnn_forward.1} parent=1 // pred_check
      _
    $region11: #{char_rnn_forward.1} parent=1 // pred_check_branch
      %42 = sbr.rel (0) target = $region13
    $region12: #{char_rnn_forward.1} parent=1 // pred_region
      _
    $region13: #{char_rnn_forward.1} parent=1 // pred_fallthru
      _
    // Predicated region
    $region14: #{char_rnn_forward.1} parent=1 // pred_check
      _
    $region15: #{char_rnn_forward.1} parent=1 // pred_check_branch
      %44 = sbr.rel (0) target = $region17
    $region16: #{char_rnn_forward.1} parent=1 // pred_region
      %46 = vsyncadd [#allocation6], 0
      %s47 = sshll.u32 %s3, 4
      %s48 = int_to_ptr.hbm [resolvable:$true] %s47
      %s49 = sshll.u32 [#allocation5], 4
      %s50 = int_to_ptr.vmem [resolvable:$true] %s49
      %55 = dma.hbm_to_vmem [thread:$0]  %s48, 256, %s50, [#allocation6], 128, 128, 8
    $region17: #{char_rnn_forward.1} parent=1 // pred_fallthru
      _
    // Predicated region
    $region18: #{char_rnn_forward.1} parent=1 // pred_check
      _
    $region19: #{char_rnn_forward.1} parent=1 // pred_check_branch
      %57 = sbr.rel (0) target = $region21
    $region20: #{char_rnn_forward.1} parent=1 // pred_region
      %59 = vsyncadd [#allocation6], 0
      %s60 = sshll.u32 %s4, 4
      %s61 = int_to_ptr.hbm [resolvable:$true] %s60
      %s62 = sshll.u32 [#allocation7], 4
      %s63 = int_to_ptr.vmem [resolvable:$true] %s62
      %68 = dma.hbm_to_vmem [thread:$0]  %s61, 512, %s63, [#allocation6], 128, 128, 8
    $region21: #{char_rnn_forward.1} parent=1 // pred_fallthru
      _
    // Predicated region
    $region22: #{char_rnn_forward.1} parent=1 // pred_check
      _
    $region23: #{char_rnn_forward.1} parent=1 // pred_check_branch
      %70 = sbr.rel (0) target = $region25
    $region24: #{char_rnn_forward.1} parent=1 // pred_region
      _
    $region25: #{char_rnn_forward.1} parent=1 // pred_fallthru
      _
    // Predicated region
    $region26: #{char_rnn_forward.1} parent=1 // pred_check
      _
    $region27: #{char_rnn_forward.1} parent=1 // pred_check_branch
      %72 = sbr.rel (0) target = $region29
    $region28: #{char_rnn_forward.1} parent=1 // pred_region
      _
    $region29: #{char_rnn_forward.1} parent=1 // pred_fallthru
      _
    // Predicated region
    $region30: #{char_rnn_forward.1} parent=1 // pred_check
      _
    $region31: #{char_rnn_forward.1} parent=1 // pred_check_branch
      %74 = sbr.rel (0) target = $region33
    $region32: #{char_rnn_forward.1} parent=1 // pred_region
      _
    $region33: #{char_rnn_forward.1} parent=1 // pred_fallthru
      _
    // Predicated region
    $region34: #{char_rnn_forward.1} parent=1 // pred_check
      _
    $region35: #{char_rnn_forward.1} parent=1 // pred_check_branch
      %76 = sbr.rel (0) target = $region37
    $region36: #{char_rnn_forward.1} parent=1 // pred_region
      _
    $region37: #{char_rnn_forward.1} parent=1 // pred_fallthru
      _
    // Predicated region
    $region38: #{char_rnn_forward.1} parent=1 // pred_check
      _
    $region39: #{char_rnn_forward.1} parent=1 // pred_check_branch
      %78 = sbr.rel (0) target = $region41
    $region40: #{char_rnn_forward.1} parent=1 // pred_region
      _
    $region41: #{char_rnn_forward.1} parent=1 // pred_fallthru
      _
    // Predicated region
    $region42: #{char_rnn_forward.1} parent=1 // pred_check
      _
    $region43: #{char_rnn_forward.1} parent=1 // pred_check_branch
      %80 = sbr.rel (0) target = $region45
    $region44: #{char_rnn_forward.1} parent=1 // pred_region
      %82 = vsyncadd [#allocation9], 0
      %s83 = sshll.u32 %s10, 4
      %s84 = int_to_ptr.hbm [resolvable:$true] %s83
      %s85 = sshll.u32 [#allocation8], 4
      %s86 = int_to_ptr.vmem [resolvable:$true] %s85
      %91 = dma.hbm_to_vmem [thread:$0]  %s84, 512, %s86, [#allocation9], 128, 128, 8
    $region45: #{char_rnn_forward.1} parent=1 // pred_fallthru
      _
    // Predicated region
    $region46: #{char_rnn_forward.1} parent=1 // pred_check
      _
    $region47: #{char_rnn_forward.1} parent=1 // pred_check_branch
      %93 = sbr.rel (0) target = $region49
    $region48: #{char_rnn_forward.1} parent=1 // pred_region
      %95 = vsyncadd [#allocation9], 0
      %s97 = sshll.u32 %s11, 4
      %s98 = int_to_ptr.hbm [resolvable:$true] %s97
      %s99 = sshll.u32 [#allocation10], 4
      %s100 = int_to_ptr.vmem [resolvable:$true] %s99
      %102 = dma.hbm_to_vmem [thread:$0]  %s98, 16, %s100, [#allocation9]
    $region49: #{char_rnn_forward.1} parent=1 // pred_fallthru
      _
    // Predicated region
    $region50: #{char_rnn_forward.1} parent=1 // pred_check
      _
    $region51: #{char_rnn_forward.1} parent=1 // pred_check_branch
      %104 = sbr.rel (0) target = $region53
    $region52: #{char_rnn_forward.1} parent=1 // pred_region
      _
    $region53: #{char_rnn_forward.1} parent=1 // pred_fallthru
      _
    // Predicated region
    $region54: #{char_rnn_forward.1} parent=1 // pred_check
      _
    $region55: #{char_rnn_forward.1} parent=1 // pred_check_branch
      %106 = sbr.rel (0) target = $region57
    $region56: #{char_rnn_forward.1} parent=1 // pred_region
      %108 = vsyncadd [#allocation12], 0
      %s110 = sshll.u32 %s13, 4
      %s111 = int_to_ptr.hbm [resolvable:$true] %s110
      %s112 = sshll.u32 [#allocation11], 4
      %s113 = int_to_ptr.vmem [resolvable:$true] %s112
      %115 = dma.hbm_to_vmem [thread:$0]  %s111, 16, %s113, [#allocation12]
    $region57: #{char_rnn_forward.1} parent=1 // pred_fallthru
      _
    // Predicated region
    $region58: #{char_rnn_forward.1} parent=1 // pred_check
      _
    $region59: #{char_rnn_forward.1} parent=1 // pred_check_branch
      %117 = sbr.rel (0) target = $region61
    $region60: #{char_rnn_forward.1} parent=1 // pred_region
      %119 = dma.done [#allocation3], 256
    $region61: #{char_rnn_forward.1} parent=1 // pred_fallthru
      _
    // Predicated region
    $region62: #{char_rnn_forward.1} parent=1 // pred_check
      _
    $region63: #{char_rnn_forward.1} parent=1 // pred_check_branch
      %121 = sbr.rel (0) target = $region65
    $region64: #{char_rnn_forward.1} parent=1 // pred_region
      %123 = dma.done [#allocation6], 256
    $region65: #{char_rnn_forward.1} parent=1 // pred_fallthru
      _
    // Predicated region
    $region66: #{char_rnn_forward.1} parent=1 // pred_check
      _
    $region67: #{char_rnn_forward.1} parent=1 // pred_check_branch
      %125 = sbr.rel (0) target = $region69
    $region68: #{char_rnn_forward.1} parent=1 // pred_region
      %127 = dma.done [#allocation6], 512
    $region69: #{char_rnn_forward.1} parent=1 // pred_fallthru
      _
    // Predicated region
    $region70: #{char_rnn_forward.1} parent=1 // pred_check
      _
    $region71: #{char_rnn_forward.1} parent=1 // pred_check_branch
      %129 = sbr.rel (0) target = $region73
    $region72: #{char_rnn_forward.1} parent=1 // pred_region
      %131 = dma.done [#allocation9], 512
    $region73: #{char_rnn_forward.1} parent=1 // pred_fallthru
      _
    // Predicated region
    $region74: #{char_rnn_forward.1} parent=1 // pred_check
      _
    $region75: #{char_rnn_forward.1} parent=1 // pred_check_branch
      %133 = sbr.rel (0) target = $region77
    $region76: #{char_rnn_forward.1} parent=1 // pred_region
      %135 = dma.done [#allocation9], 16
    $region77: #{char_rnn_forward.1} parent=1 // pred_fallthru
      _
    // Predicated region
    $region78: #{char_rnn_forward.1} parent=1 // pred_check
      _
    $region79: #{char_rnn_forward.1} parent=1 // pred_check_branch
      %137 = sbr.rel (0) target = $region81
    $region80: #{char_rnn_forward.1} parent=1 // pred_region
      %139 = dma.done [#allocation12], 16
    $region81: #{char_rnn_forward.1} parent=1 // pred_fallthru
      _
    %v140 = vld [vmem:[%s0] sm:$0xff]
    %v141 = vld [vmem:[%s0 + $0x8] sm:$0xff]
    %v142 = vlaneseq
    %v143 = vand.u32 %v142, 127
    %144 = vset.pattern.permute.xlu0 0
    %145 = vperm.xlu0 %144, %v140
    %v146 = vpop.permute.xlu0 %145
    %147 = vset.pattern.permute.xlu0 0
    %148 = vperm.xlu0 %147, %v141
    %v149 = vpop.permute.xlu0 %148
    %vm150 = vcmp.eq.s32.totalorder %v143, %v146
    %vm151 = vcmp.eq.s32.totalorder %v143, %v149
    %v152 = vsel %vm150, 1, 0
    %v153 = vsel %vm151, 1, 0
    %v154 = vcvt.s32.f32 %v152
    %v155 = vcvt.s32.f32 %v153
    %v156 = vld [vmem:[#allocation2] sm:$0xff]
    %v157 = vld [vmem:[#allocation2 + $0x8] sm:$0xff]
    %vm158 = vcmask 130048
    %v160 = vsel %vm158, %v154, 0
    %v163 = vsel %vm158, %v155, 0
    %165 = vmatpush.msra.mxu0 0.0
    %166 = vmatpush.msra.mxu0 0.0
    %167 = vmatpush.msra.mxu0 0.0
    %168 = vmatpush.msra.mxu0 0.0
    %169 = vmatpush.msra.mxu0 0.0
    %170 = vmatpush.msra.mxu0 0.0
    %171 = vmatpush.msra.mxu0 0.0
    %172 = vmatpush.msra.mxu0 0.0
    %173 = vmatpush.msra.mxu0 0.0
    %174 = vmatpush.msra.mxu0 0.0
    %175 = vmatpush.msra.mxu0 0.0
    %176 = vmatpush.msra.mxu0 0.0
    %177 = vmatpush.msra.mxu0 0.0
    %178 = vmatpush.msra.mxu0 0.0
    %179 = vmatpush.msra.mxu0 %v157
    %180 = vmatpush.msra.mxu0 %v156
    %181 = vmatmul.f32.gmra.mxu0 %v160
    %v182 = vpop.f32.mrf.mxu0
    %v183 = vadd.f32 0.0, %v182
    %184 = vmatmul.f32.gmra.mxu0 %v163
    %v185 = vpop.f32.mrf.mxu0
    %v186 = vadd.f32 0.0, %v185
    %187 = vdwg.mxu0
    %v188 = vld [vmem:[#allocation5] sm:$0xff]
    %v189 = vld [vmem:[#allocation5 + $0x8] sm:$0xff]
    %v190 = vld [vmem:[%s5] sm:$0x1]
    %v192 = vperm.slane %v190, 0
    %v195 = vsel %vm158, %v183, 0
    %v198 = vsel %vm158, %v186, 0
    %200 = vmatpush.msra.mxu0 0.0
    %201 = vmatpush.msra.mxu0 0.0
    %202 = vmatpush.msra.mxu0 0.0
    %203 = vmatpush.msra.mxu0 0.0
    %204 = vmatpush.msra.mxu0 0.0
    %205 = vmatpush.msra.mxu0 0.0
    %206 = vmatpush.msra.mxu0 0.0
    %207 = vmatpush.msra.mxu0 0.0
    %208 = vmatpush.msra.mxu0 0.0
    %209 = vmatpush.msra.mxu0 0.0
    %210 = vmatpush.msra.mxu0 0.0
    %211 = vmatpush.msra.mxu0 0.0
    %212 = vmatpush.msra.mxu0 0.0
    %213 = vmatpush.msra.mxu0 0.0
    %214 = vmatpush.msra.mxu0 %v189
    %215 = vmatpush.msra.mxu0 %v188
    %216 = vmatmul.f32.gmra.mxu0 %v195
    %v217 = vpop.f32.mrf.mxu0
    %v218 = vadd.f32 %v192, %v217
    %219 = vmatmul.f32.gmra.mxu0 %v198
    %v220 = vpop.f32.mrf.mxu0
    %v221 = vadd.f32 %v192, %v220
    %222 = vdwg.mxu0
    %v223 = vld [vmem:[#allocation7] sm:$0xff]
    %v224 = vld [vmem:[#allocation7 + $0x8] sm:$0xff]
    %v225 = vld [vmem:[#allocation7 + $0x10] sm:$0xff]
    %v226 = vld [vmem:[#allocation7 + $0x18] sm:$0xff]
    %v227 = vld [vmem:[%s6] sm:$0x1]
    %v228 = vld [vmem:[%s7] sm:$0xff]
    %v229 = vld [vmem:[%s7 + $0x8] sm:$0xff]
    %v230 = vld [vmem:[%s7 + $0x10] sm:$0xff]
    %v231 = vld [vmem:[%s7 + $0x18] sm:$0xff]
    %v232 = vld [vmem:[%s7 + $0x20] sm:$0xff]
    %v233 = vld [vmem:[%s7 + $0x28] sm:$0xff]
    %v234 = vld [vmem:[%s7 + $0x30] sm:$0xff]
    %v235 = vld [vmem:[%s7 + $0x38] sm:$0xff]
    %v236 = vld [vmem:[%s8] sm:$0x1]
    %v237 = vld [vmem:[%s9] sm:$0x1]
    %v238 = vld [vmem:[%s2] sm:$0x3]
    %s239 = scalar_lea.vmem %s2, 2
    %v240 = vld [vmem:[%s239] sm:$0x3]
    %vm241 = vcmask 261120
    %v243 = vsel %vm241, %v238, 0
    %245 = vmatpush.msra.mxu0 0.0
    %246 = vmatpush.msra.mxu0 0.0
    %247 = vmatpush.msra.mxu0 0.0
    %248 = vmatpush.msra.mxu0 0.0
    %249 = vmatpush.msra.mxu0 0.0
    %250 = vmatpush.msra.mxu0 0.0
    %251 = vmatpush.msra.mxu0 0.0
    %252 = vmatpush.msra.mxu0 0.0
    %253 = vmatpush.msra.mxu0 0.0
    %254 = vmatpush.msra.mxu0 0.0
    %255 = vmatpush.msra.mxu0 0.0
    %256 = vmatpush.msra.mxu0 0.0
    %257 = vmatpush.msra.mxu0 %v226
    %258 = vmatpush.msra.mxu0 %v225
    %259 = vmatpush.msra.mxu0 %v224
    %260 = vmatpush.msra.mxu0 %v223
    %261 = vmatmul.f32.gmra.mxu0 %v243
    %v262 = vpop.f32.mrf.mxu0
    %v263 = vadd.f32 0.0, %v262
    %264 = vdwg.mxu0
    %v265 = vadd.f32 %v218, %v263
    %v266 = vmul.f32 %v265, 0.5
    %v267 = vtanh.pop %v266
    %v268 = vmul.f32 %v267, 0.5
    %v269 = vadd.f32 %v268, 0.5
    %v271 = vperm.slane %v227, 0
    %272 = vrot.lane.b32.xlu0 %v271, 64
    %v273 = vpop.permute.xlu0 %272
    %v275 = vadd.f32 %v263, %v273
    %277 = vrot.lane.b32.xlu0 %v275, 64
    %v278 = vpop.permute.xlu0 %277
    %v280 = vmul.f32 %v269, %v278
    %282 = vrot.lane.b32.xlu0 %v280, 64
    %v283 = vpop.permute.xlu0 %282
    %v285 = vadd.f32 %v218, %v283
    %v286 = vtanh.pop %v285
    %288 = vrot.lane.b32.xlu0 %v286, 64
    %v289 = vpop.permute.xlu0 %288
    %v291 = vsub.f32 %v238, %v289
    %293 = vrot.lane.b32.xlu0 %v291, 32
    %v294 = vpop.permute.xlu0 %293
    %v296 = vmul.f32 %v269, %v294
    %298 = vrot.lane.b32.xlu0 %v296, 32
    %v299 = vpop.permute.xlu0 %298
    %v301 = vadd.f32 %v286, %v299
    %303 = vrot.lane.b32.xlu0 %v301, 64
    %v304 = vpop.permute.xlu0 %303
    %307 = vrot.lane.b32.xlu0 %v240, 32
    %v308 = vpop.permute.xlu0 %307
    %v310 = vsel %vm241, %v304, %v308
    %vm311 = vcmask 523264
    %v313 = vsel %vm311, %v310, 0
    %315 = vmatpush.msra.mxu0 0.0
    %316 = vmatpush.msra.mxu0 0.0
    %317 = vmatpush.msra.mxu0 0.0
    %318 = vmatpush.msra.mxu0 0.0
    %319 = vmatpush.msra.mxu0 0.0
    %320 = vmatpush.msra.mxu0 0.0
    %321 = vmatpush.msra.mxu0 0.0
    %322 = vmatpush.msra.mxu0 0.0
    %323 = vmatpush.msra.mxu0 %v235
    %324 = vmatpush.msra.mxu0 %v234
    %325 = vmatpush.msra.mxu0 %v233
    %326 = vmatpush.msra.mxu0 %v232
    %327 = vmatpush.msra.mxu0 %v231
    %328 = vmatpush.msra.mxu0 %v230
    %329 = vmatpush.msra.mxu0 %v229
    %330 = vmatpush.msra.mxu0 %v228
    %331 = vmatmul.f32.gmra.mxu0 %v313
    %v332 = vpop.f32.mrf.mxu0
    %v333 = vadd.f32 0.0, %v332
    %334 = vdwg.mxu0
    %v336 = vperm.slane %v236, 0
    %v338 = vadd.f32 %v333, %v336
    %v339 = vmul.f32 %v338, 0.5
    %v340 = vtanh.pop %v339
    %v341 = vmul.f32 %v340, 0.5
    %v342 = vadd.f32 %v341, 0.5
    %v344 = vperm.slane %v237, 0
    %345 = vrot.lane.b32.xlu0 %v344, 96
    %v346 = vpop.permute.xlu0 %345
    %v348 = vadd.f32 %v333, %v346
    %350 = vrot.lane.b32.xlu0 %v348, 32
    %v351 = vpop.permute.xlu0 %350
    %v353 = vmul.f32 %v342, %v351
    %355 = vrot.lane.b32.xlu0 %v353, 64
    %v356 = vpop.permute.xlu0 %355
    %v358 = vadd.f32 %v338, %v356
    %v359 = vtanh.pop %v358
    %361 = vrot.lane.b32.xlu0 %v359, 64
    %v362 = vpop.permute.xlu0 %361
    %v364 = vsub.f32 %v240, %v362
    %366 = vrot.lane.b32.xlu0 %v364, 32
    %v367 = vpop.permute.xlu0 %366
    %v369 = vmul.f32 %v342, %v367
    %371 = vrot.lane.b32.xlu0 %v369, 32
    %v372 = vpop.permute.xlu0 %371
    %v374 = vadd.f32 %v359, %v372
    %v375 = vsel %vm241, %v304, 0
    %377 = vmatpush.msra.mxu0 0.0
    %378 = vmatpush.msra.mxu0 0.0
    %379 = vmatpush.msra.mxu0 0.0
    %380 = vmatpush.msra.mxu0 0.0
    %381 = vmatpush.msra.mxu0 0.0
    %382 = vmatpush.msra.mxu0 0.0
    %383 = vmatpush.msra.mxu0 0.0
    %384 = vmatpush.msra.mxu0 0.0
    %385 = vmatpush.msra.mxu0 0.0
    %386 = vmatpush.msra.mxu0 0.0
    %387 = vmatpush.msra.mxu0 0.0
    %388 = vmatpush.msra.mxu0 0.0
    %389 = vmatpush.msra.mxu0 %v226
    %390 = vmatpush.msra.mxu0 %v225
    %391 = vmatpush.msra.mxu0 %v224
    %392 = vmatpush.msra.mxu0 %v223
    %393 = vmatmul.f32.gmra.mxu0 %v375
    %v394 = vpop.f32.mrf.mxu0
    %v395 = vadd.f32 0.0, %v394
    %396 = vdwg.mxu0
    %v398 = vrot.slane %v395, 6
    %v400 = vadd.f32 %v218, %v398
    %v401 = vmul.f32 %v400, 0.5
    %v402 = vtanh.pop %v401
    %v403 = vmul.f32 %v402, 0.5
    %v404 = vadd.f32 %v403, 0.5
    %v405 = vadd.f32 %v395, %v273
    %v407 = vrot.slane %v405, 6
    %408 = vrot.lane.b32.xlu0 %v407, 64
    %v409 = vpop.permute.xlu0 %408
    %v411 = vmul.f32 %v404, %v409
    %413 = vrot.lane.b32.xlu0 %v411, 64
    %v414 = vpop.permute.xlu0 %413
    %v416 = vadd.f32 %v218, %v414
    %v417 = vtanh.pop %v416
    %v419 = vrot.slane %v417, 2
    %v421 = vsub.f32 %v301, %v419
    %v423 = vrot.slane %v421, 6
    %424 = vrot.lane.b32.xlu0 %v423, 96
    %v425 = vpop.permute.xlu0 %424
    %v427 = vmul.f32 %v404, %v425
    %429 = vrot.lane.b32.xlu0 %v427, 32
    %v430 = vpop.permute.xlu0 %429
    %v432 = vadd.f32 %v417, %v430
    %434 = vrot.lane.b32.xlu0 %v432, 64
    %v435 = vpop.permute.xlu0 %434
    %v438 = vrot.slane %v374, 6
    %439 = vrot.lane.b32.xlu0 %v438, 96
    %v440 = vpop.permute.xlu0 %439
    %v442 = vsel %vm241, %v435, %v440
    %v444 = vrot.slane %v442, 2
    %v445 = vsel %vm311, %v444, 0
    %447 = vmatpush.msra.mxu0 0.0
    %448 = vmatpush.msra.mxu0 0.0
    %449 = vmatpush.msra.mxu0 0.0
    %450 = vmatpush.msra.mxu0 0.0
    %451 = vmatpush.msra.mxu0 0.0
    %452 = vmatpush.msra.mxu0 0.0
    %453 = vmatpush.msra.mxu0 0.0
    %454 = vmatpush.msra.mxu0 0.0
    %455 = vmatpush.msra.mxu0 %v235
    %456 = vmatpush.msra.mxu0 %v234
    %457 = vmatpush.msra.mxu0 %v233
    %458 = vmatpush.msra.mxu0 %v232
    %459 = vmatpush.msra.mxu0 %v231
    %460 = vmatpush.msra.mxu0 %v230
    %461 = vmatpush.msra.mxu0 %v229
    %462 = vmatpush.msra.mxu0 %v228
    %463 = vmatmul.f32.gmra.mxu0 %v445
    %v464 = vpop.f32.mrf.mxu0
    %v465 = vadd.f32 0.0, %v464
    %466 = vdwg.mxu0
    %v467 = vadd.f32 %v465, %v336
    %v468 = vmul.f32 %v467, 0.5
    %v469 = vtanh.pop %v468
    %v470 = vmul.f32 %v469, 0.5
    %v471 = vadd.f32 %v470, 0.5
    %v472 = vadd.f32 %v465, %v346
    %474 = vrot.lane.b32.xlu0 %v472, 32
    %v475 = vpop.permute.xlu0 %474
    %v477 = vmul.f32 %v471, %v475
    %479 = vrot.lane.b32.xlu0 %v477, 64
    %v480 = vpop.permute.xlu0 %479
    %v482 = vadd.f32 %v467, %v480
    %v483 = vtanh.pop %v482
    %v484 = vsub.f32 %v374, %v483
    %486 = vrot.lane.b32.xlu0 %v484, 96
    %v487 = vpop.permute.xlu0 %486
    %v489 = vmul.f32 %v471, %v487
    %491 = vrot.lane.b32.xlu0 %v489, 32
    %v492 = vpop.permute.xlu0 %491
    %v494 = vadd.f32 %v483, %v492
    %v495 = vrot.slane %v432, 2
    %496 = vrot.lane.b32.xlu0 %v495, 64
    %v497 = vpop.permute.xlu0 %496
    %v498 = vsel %vm241, %v497, 0
    %500 = vmatpush.msra.mxu0 0.0
    %501 = vmatpush.msra.mxu0 0.0
    %502 = vmatpush.msra.mxu0 0.0
    %503 = vmatpush.msra.mxu0 0.0
    %504 = vmatpush.msra.mxu0 0.0
    %505 = vmatpush.msra.mxu0 0.0
    %506 = vmatpush.msra.mxu0 0.0
    %507 = vmatpush.msra.mxu0 0.0
    %508 = vmatpush.msra.mxu0 0.0
    %509 = vmatpush.msra.mxu0 0.0
    %510 = vmatpush.msra.mxu0 0.0
    %511 = vmatpush.msra.mxu0 0.0
    %512 = vmatpush.msra.mxu0 %v226
    %513 = vmatpush.msra.mxu0 %v225
    %514 = vmatpush.msra.mxu0 %v224
    %515 = vmatpush.msra.mxu0 %v223
    %516 = vmatmul.f32.gmra.mxu0 %v498
    %v517 = vpop.f32.mrf.mxu0
    %v518 = vadd.f32 0.0, %v517
    %519 = vdwg.mxu0
    %v521 = vrot.slane %v518, 4
    %v523 = vadd.f32 %v218, %v521
    %v524 = vmul.f32 %v523, 0.5
    %v525 = vtanh.pop %v524
    %v526 = vmul.f32 %v525, 0.5
    %v527 = vadd.f32 %v526, 0.5
    %v528 = vadd.f32 %v518, %v273
    %v530 = vrot.slane %v528, 4
    %531 = vrot.lane.b32.xlu0 %v530, 64
    %v532 = vpop.permute.xlu0 %531
    %v534 = vmul.f32 %v527, %v532
    %536 = vrot.lane.b32.xlu0 %v534, 64
    %v537 = vpop.permute.xlu0 %536
    %v539 = vadd.f32 %v218, %v537
    %v540 = vtanh.pop %v539
    %v542 = vrot.slane %v540, 2
    %v544 = vsub.f32 %v432, %v542
    %v546 = vrot.slane %v544, 6
    %547 = vrot.lane.b32.xlu0 %v546, 96
    %v548 = vpop.permute.xlu0 %547
    %v550 = vmul.f32 %v527, %v548
    %552 = vrot.lane.b32.xlu0 %v550, 32
    %v553 = vpop.permute.xlu0 %552
    %v555 = vadd.f32 %v540, %v553
    %557 = vrot.lane.b32.xlu0 %v555, 64
    %v558 = vpop.permute.xlu0 %557
    %v561 = vrot.slane %v494, 4
    %562 = vrot.lane.b32.xlu0 %v561, 96
    %v563 = vpop.permute.xlu0 %562
    %v565 = vsel %vm241, %v558, %v563
    %v567 = vrot.slane %v565, 4
    %v568 = vsel %vm311, %v567, 0
    %570 = vmatpush.msra.mxu0 0.0
    %571 = vmatpush.msra.mxu0 0.0
    %572 = vmatpush.msra.mxu0 0.0
    %573 = vmatpush.msra.mxu0 0.0
    %574 = vmatpush.msra.mxu0 0.0
    %575 = vmatpush.msra.mxu0 0.0
    %576 = vmatpush.msra.mxu0 0.0
    %577 = vmatpush.msra.mxu0 0.0
    %578 = vmatpush.msra.mxu0 %v235
    %579 = vmatpush.msra.mxu0 %v234
    %580 = vmatpush.msra.mxu0 %v233
    %581 = vmatpush.msra.mxu0 %v232
    %582 = vmatpush.msra.mxu0 %v231
    %583 = vmatpush.msra.mxu0 %v230
    %584 = vmatpush.msra.mxu0 %v229
    %585 = vmatpush.msra.mxu0 %v228
    %586 = vmatmul.f32.gmra.mxu0 %v568
    %v587 = vpop.f32.mrf.mxu0
    %v588 = vadd.f32 0.0, %v587
    %589 = vdwg.mxu0
    %v590 = vadd.f32 %v588, %v336
    %v591 = vmul.f32 %v590, 0.5
    %v592 = vtanh.pop %v591
    %v593 = vmul.f32 %v592, 0.5
    %v594 = vadd.f32 %v593, 0.5
    %v595 = vadd.f32 %v588, %v346
    %597 = vrot.lane.b32.xlu0 %v595, 32
    %v598 = vpop.permute.xlu0 %597
    %v600 = vmul.f32 %v594, %v598
    %602 = vrot.lane.b32.xlu0 %v600, 64
    %v603 = vpop.permute.xlu0 %602
    %v605 = vadd.f32 %v590, %v603
    %v606 = vtanh.pop %v605
    %v607 = vsub.f32 %v494, %v606
    %609 = vrot.lane.b32.xlu0 %v607, 96
    %v610 = vpop.permute.xlu0 %609
    %v612 = vmul.f32 %v594, %v610
    %614 = vrot.lane.b32.xlu0 %v612, 32
    %v615 = vpop.permute.xlu0 %614
    %v617 = vadd.f32 %v606, %v615
    %v618 = vrot.slane %v555, 4
    %619 = vrot.lane.b32.xlu0 %v618, 64
    %v620 = vpop.permute.xlu0 %619
    %v621 = vsel %vm241, %v620, 0
    %623 = vmatpush.msra.mxu0 0.0
    %624 = vmatpush.msra.mxu0 0.0
    %625 = vmatpush.msra.mxu0 0.0
    %626 = vmatpush.msra.mxu0 0.0
    %627 = vmatpush.msra.mxu0 0.0
    %628 = vmatpush.msra.mxu0 0.0
    %629 = vmatpush.msra.mxu0 0.0
    %630 = vmatpush.msra.mxu0 0.0
    %631 = vmatpush.msra.mxu0 0.0
    %632 = vmatpush.msra.mxu0 0.0
    %633 = vmatpush.msra.mxu0 0.0
    %634 = vmatpush.msra.mxu0 0.0
    %635 = vmatpush.msra.mxu0 %v226
    %636 = vmatpush.msra.mxu0 %v225
    %637 = vmatpush.msra.mxu0 %v224
    %638 = vmatpush.msra.mxu0 %v223
    %639 = vmatmul.f32.gmra.mxu0 %v621
    %v640 = vpop.f32.mrf.mxu0
    %v641 = vadd.f32 0.0, %v640
    %642 = vdwg.mxu0
    %v644 = vrot.slane %v641, 2
    %v646 = vadd.f32 %v218, %v644
    %v647 = vmul.f32 %v646, 0.5
    %v648 = vtanh.pop %v647
    %v649 = vmul.f32 %v648, 0.5
    %v650 = vadd.f32 %v649, 0.5
    %v651 = vadd.f32 %v641, %v273
    %v653 = vrot.slane %v651, 2
    %654 = vrot.lane.b32.xlu0 %v653, 64
    %v655 = vpop.permute.xlu0 %654
    %v657 = vmul.f32 %v650, %v655
    %659 = vrot.lane.b32.xlu0 %v657, 64
    %v660 = vpop.permute.xlu0 %659
    %v662 = vadd.f32 %v218, %v660
    %v663 = vtanh.pop %v662
    %v665 = vrot.slane %v663, 2
    %v667 = vsub.f32 %v555, %v665
    %v669 = vrot.slane %v667, 6
    %670 = vrot.lane.b32.xlu0 %v669, 96
    %v671 = vpop.permute.xlu0 %670
    %v673 = vmul.f32 %v650, %v671
    %675 = vrot.lane.b32.xlu0 %v673, 32
    %v676 = vpop.permute.xlu0 %675
    %v678 = vadd.f32 %v663, %v676
    %680 = vrot.lane.b32.xlu0 %v678, 64
    %v681 = vpop.permute.xlu0 %680
    %v684 = vrot.slane %v617, 2
    %685 = vrot.lane.b32.xlu0 %v684, 96
    %v686 = vpop.permute.xlu0 %685
    %v688 = vsel %vm241, %v681, %v686
    %v690 = vrot.slane %v688, 6
    %v691 = vsel %vm311, %v690, 0
    %693 = vmatpush.msra.mxu0 0.0
    %694 = vmatpush.msra.mxu0 0.0
    %695 = vmatpush.msra.mxu0 0.0
    %696 = vmatpush.msra.mxu0 0.0
    %697 = vmatpush.msra.mxu0 0.0
    %698 = vmatpush.msra.mxu0 0.0
    %699 = vmatpush.msra.mxu0 0.0
    %700 = vmatpush.msra.mxu0 0.0
    %701 = vmatpush.msra.mxu0 %v235
    %702 = vmatpush.msra.mxu0 %v234
    %703 = vmatpush.msra.mxu0 %v233
    %704 = vmatpush.msra.mxu0 %v232
    %705 = vmatpush.msra.mxu0 %v231
    %706 = vmatpush.msra.mxu0 %v230
    %707 = vmatpush.msra.mxu0 %v229
    %708 = vmatpush.msra.mxu0 %v228
    %709 = vmatmul.f32.gmra.mxu0 %v691
    %v710 = vpop.f32.mrf.mxu0
    %v711 = vadd.f32 0.0, %v710
    %712 = vdwg.mxu0
    %v713 = vadd.f32 %v711, %v336
    %v714 = vmul.f32 %v713, 0.5
    %v715 = vtanh.pop %v714
    %v716 = vmul.f32 %v715, 0.5
    %v717 = vadd.f32 %v716, 0.5
    %v718 = vadd.f32 %v711, %v346
    %720 = vrot.lane.b32.xlu0 %v718, 32
    %v721 = vpop.permute.xlu0 %720
    %v723 = vmul.f32 %v717, %v721
    %725 = vrot.lane.b32.xlu0 %v723, 64
    %v726 = vpop.permute.xlu0 %725
    %v728 = vadd.f32 %v713, %v726
    %v729 = vtanh.pop %v728
    %v730 = vsub.f32 %v617, %v729
    %732 = vrot.lane.b32.xlu0 %v730, 96
    %v733 = vpop.permute.xlu0 %732
    %v735 = vmul.f32 %v717, %v733
    %737 = vrot.lane.b32.xlu0 %v735, 32
    %v738 = vpop.permute.xlu0 %737
    %v740 = vadd.f32 %v729, %v738
    %v741 = vrot.slane %v678, 6
    %742 = vrot.lane.b32.xlu0 %v741, 64
    %v743 = vpop.permute.xlu0 %742
    %v744 = vsel %vm241, %v743, 0
    %746 = vmatpush.msra.mxu0 0.0
    %747 = vmatpush.msra.mxu0 0.0
    %748 = vmatpush.msra.mxu0 0.0
    %749 = vmatpush.msra.mxu0 0.0
    %750 = vmatpush.msra.mxu0 0.0
    %751 = vmatpush.msra.mxu0 0.0
    %752 = vmatpush.msra.mxu0 0.0
    %753 = vmatpush.msra.mxu0 0.0
    %754 = vmatpush.msra.mxu0 0.0
    %755 = vmatpush.msra.mxu0 0.0
    %756 = vmatpush.msra.mxu0 0.0
    %757 = vmatpush.msra.mxu0 0.0
    %758 = vmatpush.msra.mxu0 %v226
    %759 = vmatpush.msra.mxu0 %v225
    %760 = vmatpush.msra.mxu0 %v224
    %761 = vmatpush.msra.mxu0 %v223
    %762 = vmatmul.f32.gmra.mxu0 %v744
    %v763 = vpop.f32.mrf.mxu0
    %v764 = vadd.f32 0.0, %v763
    %765 = vdwg.mxu0
    %v766 = vadd.f32 %v221, %v764
    %v767 = vmul.f32 %v766, 0.5
    %v768 = vtanh.pop %v767
    %v769 = vmul.f32 %v768, 0.5
    %v770 = vadd.f32 %v769, 0.5
    %v771 = vadd.f32 %v764, %v273
    %773 = vrot.lane.b32.xlu0 %v771, 64
    %v774 = vpop.permute.xlu0 %773
    %v776 = vmul.f32 %v770, %v774
    %778 = vrot.lane.b32.xlu0 %v776, 64
    %v779 = vpop.permute.xlu0 %778
    %v781 = vadd.f32 %v221, %v779
    %v782 = vtanh.pop %v781
    %v784 = vrot.slane %v782, 2
    %v786 = vsub.f32 %v678, %v784
    %v788 = vrot.slane %v786, 6
    %789 = vrot.lane.b32.xlu0 %v788, 96
    %v790 = vpop.permute.xlu0 %789
    %v792 = vmul.f32 %v770, %v790
    %794 = vrot.lane.b32.xlu0 %v792, 32
    %v795 = vpop.permute.xlu0 %794
    %v797 = vadd.f32 %v782, %v795
    %799 = vrot.lane.b32.xlu0 %v797, 64
    %v800 = vpop.permute.xlu0 %799
    %803 = vrot.lane.b32.xlu0 %v740, 96
    %v804 = vpop.permute.xlu0 %803
    %v806 = vsel %vm241, %v800, %v804
    %v808 = vsel %vm311, %v806, 0
    %810 = vmatpush.msra.mxu0 0.0
    %811 = vmatpush.msra.mxu0 0.0
    %812 = vmatpush.msra.mxu0 0.0
    %813 = vmatpush.msra.mxu0 0.0
    %814 = vmatpush.msra.mxu0 0.0
    %815 = vmatpush.msra.mxu0 0.0
    %816 = vmatpush.msra.mxu0 0.0
    %817 = vmatpush.msra.mxu0 0.0
    %818 = vmatpush.msra.mxu0 %v235
    %819 = vmatpush.msra.mxu0 %v234
    %820 = vmatpush.msra.mxu0 %v233
    %821 = vmatpush.msra.mxu0 %v232
    %822 = vmatpush.msra.mxu0 %v231
    %823 = vmatpush.msra.mxu0 %v230
    %824 = vmatpush.msra.mxu0 %v229
    %825 = vmatpush.msra.mxu0 %v228
    %826 = vmatmul.f32.gmra.mxu0 %v808
    %v827 = vpop.f32.mrf.mxu0
    %v828 = vadd.f32 0.0, %v827
    %829 = vdwg.mxu0
    %v830 = vadd.f32 %v828, %v336
    %v831 = vmul.f32 %v830, 0.5
    %v832 = vtanh.pop %v831
    %v833 = vmul.f32 %v832, 0.5
    %v834 = vadd.f32 %v833, 0.5
    %v835 = vadd.f32 %v828, %v346
    %837 = vrot.lane.b32.xlu0 %v835, 32
    %v838 = vpop.permute.xlu0 %837
    %v840 = vmul.f32 %v834, %v838
    %842 = vrot.lane.b32.xlu0 %v840, 64
    %v843 = vpop.permute.xlu0 %842
    %v845 = vadd.f32 %v830, %v843
    %v846 = vtanh.pop %v845
    %v847 = vsub.f32 %v740, %v846
    %849 = vrot.lane.b32.xlu0 %v847, 96
    %v850 = vpop.permute.xlu0 %849
    %v852 = vmul.f32 %v834, %v850
    %854 = vrot.lane.b32.xlu0 %v852, 32
    %v855 = vpop.permute.xlu0 %854
    %v857 = vadd.f32 %v846, %v855
    %v858 = vsel %vm241, %v800, 0
    %860 = vmatpush.msra.mxu0 0.0
    %861 = vmatpush.msra.mxu0 0.0
    %862 = vmatpush.msra.mxu0 0.0
    %863 = vmatpush.msra.mxu0 0.0
    %864 = vmatpush.msra.mxu0 0.0
    %865 = vmatpush.msra.mxu0 0.0
    %866 = vmatpush.msra.mxu0 0.0
    %867 = vmatpush.msra.mxu0 0.0
    %868 = vmatpush.msra.mxu0 0.0
    %869 = vmatpush.msra.mxu0 0.0
    %870 = vmatpush.msra.mxu0 0.0
    %871 = vmatpush.msra.mxu0 0.0
    %872 = vmatpush.msra.mxu0 %v226
    %873 = vmatpush.msra.mxu0 %v225
    %874 = vmatpush.msra.mxu0 %v224
    %875 = vmatpush.msra.mxu0 %v223
    %876 = vmatmul.f32.gmra.mxu0 %v858
    %v877 = vpop.f32.mrf.mxu0
    %v878 = vadd.f32 0.0, %v877
    %879 = vdwg.mxu0
    %v881 = vrot.slane %v878, 6
    %v883 = vadd.f32 %v221, %v881
    %v884 = vmul.f32 %v883, 0.5
    %v885 = vtanh.pop %v884
    %v886 = vmul.f32 %v885, 0.5
    %v887 = vadd.f32 %v886, 0.5
    %v888 = vadd.f32 %v878, %v273
    %v890 = vrot.slane %v888, 6
    %891 = vrot.lane.b32.xlu0 %v890, 64
    %v892 = vpop.permute.xlu0 %891
    %v894 = vmul.f32 %v887, %v892
    %896 = vrot.lane.b32.xlu0 %v894, 64
    %v897 = vpop.permute.xlu0 %896
    %v899 = vadd.f32 %v221, %v897
    %v900 = vtanh.pop %v899
    %v902 = vrot.slane %v900, 2
    %v904 = vsub.f32 %v797, %v902
    %v906 = vrot.slane %v904, 6
    %907 = vrot.lane.b32.xlu0 %v906, 96
    %v908 = vpop.permute.xlu0 %907
    %v910 = vmul.f32 %v887, %v908
    %912 = vrot.lane.b32.xlu0 %v910, 32
    %v913 = vpop.permute.xlu0 %912
    %v915 = vadd.f32 %v900, %v913
    %917 = vrot.lane.b32.xlu0 %v915, 64
    %v918 = vpop.permute.xlu0 %917
    %v921 = vrot.slane %v857, 6
    %922 = vrot.lane.b32.xlu0 %v921, 96
    %v923 = vpop.permute.xlu0 %922
    %v925 = vsel %vm241, %v918, %v923
    %v927 = vrot.slane %v925, 2
    %v928 = vsel %vm311, %v927, 0
    %930 = vmatpush.msra.mxu0 0.0
    %931 = vmatpush.msra.mxu0 0.0
    %932 = vmatpush.msra.mxu0 0.0
    %933 = vmatpush.msra.mxu0 0.0
    %934 = vmatpush.msra.mxu0 0.0
    %935 = vmatpush.msra.mxu0 0.0
    %936 = vmatpush.msra.mxu0 0.0
    %937 = vmatpush.msra.mxu0 0.0
    %938 = vmatpush.msra.mxu0 %v235
    %939 = vmatpush.msra.mxu0 %v234
    %940 = vmatpush.msra.mxu0 %v233
    %941 = vmatpush.msra.mxu0 %v232
    %942 = vmatpush.msra.mxu0 %v231
    %943 = vmatpush.msra.mxu0 %v230
    %944 = vmatpush.msra.mxu0 %v229
    %945 = vmatpush.msra.mxu0 %v228
    %946 = vmatmul.f32.gmra.mxu0 %v928
    %v947 = vpop.f32.mrf.mxu0
    %v948 = vadd.f32 0.0, %v947
    %949 = vdwg.mxu0
    %v950 = vadd.f32 %v948, %v336
    %v951 = vmul.f32 %v950, 0.5
    %v952 = vtanh.pop %v951
    %v953 = vmul.f32 %v952, 0.5
    %v954 = vadd.f32 %v953, 0.5
    %v955 = vadd.f32 %v948, %v346
    %957 = vrot.lane.b32.xlu0 %v955, 32
    %v958 = vpop.permute.xlu0 %957
    %v960 = vmul.f32 %v954, %v958
    %962 = vrot.lane.b32.xlu0 %v960, 64
    %v963 = vpop.permute.xlu0 %962
    %v965 = vadd.f32 %v950, %v963
    %v966 = vtanh.pop %v965
    %v967 = vsub.f32 %v857, %v966
    %969 = vrot.lane.b32.xlu0 %v967, 96
    %v970 = vpop.permute.xlu0 %969
    %v972 = vmul.f32 %v954, %v970
    %974 = vrot.lane.b32.xlu0 %v972, 32
    %v975 = vpop.permute.xlu0 %974
    %v977 = vadd.f32 %v966, %v975
    %v978 = vrot.slane %v915, 2
    %979 = vrot.lane.b32.xlu0 %v978, 64
    %v980 = vpop.permute.xlu0 %979
    %v981 = vsel %vm241, %v980, 0
    %983 = vmatpush.msra.mxu0 0.0
    %984 = vmatpush.msra.mxu0 0.0
    %985 = vmatpush.msra.mxu0 0.0
    %986 = vmatpush.msra.mxu0 0.0
    %987 = vmatpush.msra.mxu0 0.0
    %988 = vmatpush.msra.mxu0 0.0
    %989 = vmatpush.msra.mxu0 0.0
    %990 = vmatpush.msra.mxu0 0.0
    %991 = vmatpush.msra.mxu0 0.0
    %992 = vmatpush.msra.mxu0 0.0
    %993 = vmatpush.msra.mxu0 0.0
    %994 = vmatpush.msra.mxu0 0.0
    %995 = vmatpush.msra.mxu0 %v226
    %996 = vmatpush.msra.mxu0 %v225
    %997 = vmatpush.msra.mxu0 %v224
    %998 = vmatpush.msra.mxu0 %v223
    %999 = vmatmul.f32.gmra.mxu0 %v981
    %v1000 = vpop.f32.mrf.mxu0
    %v1001 = vadd.f32 0.0, %v1000
    %1002 = vdwg.mxu0
    %v1004 = vrot.slane %v1001, 4
    %v1006 = vadd.f32 %v221, %v1004
    %v1007 = vmul.f32 %v1006, 0.5
    %v1008 = vtanh.pop %v1007
    %v1009 = vmul.f32 %v1008, 0.5
    %v1010 = vadd.f32 %v1009, 0.5
    %v1011 = vadd.f32 %v1001, %v273
    %v1013 = vrot.slane %v1011, 4
    %1014 = vrot.lane.b32.xlu0 %v1013, 64
    %v1015 = vpop.permute.xlu0 %1014
    %v1017 = vmul.f32 %v1010, %v1015
    %1019 = vrot.lane.b32.xlu0 %v1017, 64
    %v1020 = vpop.permute.xlu0 %1019
    %v1022 = vadd.f32 %v221, %v1020
    %v1023 = vtanh.pop %v1022
    %v1025 = vrot.slane %v1023, 2
    %v1027 = vsub.f32 %v915, %v1025
    %v1029 = vrot.slane %v1027, 6
    %1030 = vrot.lane.b32.xlu0 %v1029, 96
    %v1031 = vpop.permute.xlu0 %1030
    %v1033 = vmul.f32 %v1010, %v1031
    %1035 = vrot.lane.b32.xlu0 %v1033, 32
    %v1036 = vpop.permute.xlu0 %1035
    %v1038 = vadd.f32 %v1023, %v1036
    %1040 = vrot.lane.b32.xlu0 %v1038, 64
    %v1041 = vpop.permute.xlu0 %1040
    %v1044 = vrot.slane %v977, 4
    %1045 = vrot.lane.b32.xlu0 %v1044, 96
    %v1046 = vpop.permute.xlu0 %1045
    %v1048 = vsel %vm241, %v1041, %v1046
    %v1050 = vrot.slane %v1048, 4
    %v1051 = vsel %vm311, %v1050, 0
    %1053 = vmatpush.msra.mxu0 0.0
    %1054 = vmatpush.msra.mxu0 0.0
    %1055 = vmatpush.msra.mxu0 0.0
    %1056 = vmatpush.msra.mxu0 0.0
    %1057 = vmatpush.msra.mxu0 0.0
    %1058 = vmatpush.msra.mxu0 0.0
    %1059 = vmatpush.msra.mxu0 0.0
    %1060 = vmatpush.msra.mxu0 0.0
    %1061 = vmatpush.msra.mxu0 %v235
    %1062 = vmatpush.msra.mxu0 %v234
    %1063 = vmatpush.msra.mxu0 %v233
    %1064 = vmatpush.msra.mxu0 %v232
    %1065 = vmatpush.msra.mxu0 %v231
    %1066 = vmatpush.msra.mxu0 %v230
    %1067 = vmatpush.msra.mxu0 %v229
    %1068 = vmatpush.msra.mxu0 %v228
    %1069 = vmatmul.f32.gmra.mxu0 %v1051
    %v1070 = vpop.f32.mrf.mxu0
    %v1071 = vadd.f32 0.0, %v1070
    %1072 = vdwg.mxu0
    %v1073 = vadd.f32 %v1071, %v336
    %v1074 = vmul.f32 %v1073, 0.5
    %v1075 = vtanh.pop %v1074
    %v1076 = vmul.f32 %v1075, 0.5
    %v1077 = vadd.f32 %v1076, 0.5
    %v1078 = vadd.f32 %v1071, %v346
    %1080 = vrot.lane.b32.xlu0 %v1078, 32
    %v1081 = vpop.permute.xlu0 %1080
    %v1083 = vmul.f32 %v1077, %v1081
    %1085 = vrot.lane.b32.xlu0 %v1083, 64
    %v1086 = vpop.permute.xlu0 %1085
    %v1088 = vadd.f32 %v1073, %v1086
    %v1089 = vtanh.pop %v1088
    %v1090 = vsub.f32 %v977, %v1089
    %1092 = vrot.lane.b32.xlu0 %v1090, 96
    %v1093 = vpop.permute.xlu0 %1092
    %v1095 = vmul.f32 %v1077, %v1093
    %1097 = vrot.lane.b32.xlu0 %v1095, 32
    %v1098 = vpop.permute.xlu0 %1097
    %v1100 = vadd.f32 %v1089, %v1098
    %v1101 = vrot.slane %v1038, 4
    %1102 = vrot.lane.b32.xlu0 %v1101, 64
    %v1103 = vpop.permute.xlu0 %1102
    %v1104 = vsel %vm241, %v1103, 0
    %1106 = vmatpush.msra.mxu0 0.0
    %1107 = vmatpush.msra.mxu0 0.0
    %1108 = vmatpush.msra.mxu0 0.0
    %1109 = vmatpush.msra.mxu0 0.0
    %1110 = vmatpush.msra.mxu0 0.0
    %1111 = vmatpush.msra.mxu0 0.0
    %1112 = vmatpush.msra.mxu0 0.0
    %1113 = vmatpush.msra.mxu0 0.0
    %1114 = vmatpush.msra.mxu0 0.0
    %1115 = vmatpush.msra.mxu0 0.0
    %1116 = vmatpush.msra.mxu0 0.0
    %1117 = vmatpush.msra.mxu0 0.0
    %1118 = vmatpush.msra.mxu0 %v226
    %1119 = vmatpush.msra.mxu0 %v225
    %1120 = vmatpush.msra.mxu0 %v224
    %1121 = vmatpush.msra.mxu0 %v223
    %1122 = vmatmul.f32.gmra.mxu0 %v1104
    %v1123 = vpop.f32.mrf.mxu0
    %v1124 = vadd.f32 0.0, %v1123
    %1125 = vdwg.mxu0
    %v1127 = vrot.slane %v1124, 2
    %v1129 = vadd.f32 %v221, %v1127
    %v1130 = vmul.f32 %v1129, 0.5
    %v1131 = vtanh.pop %v1130
    %v1132 = vmul.f32 %v1131, 0.5
    %v1133 = vadd.f32 %v1132, 0.5
    %v1134 = vadd.f32 %v1124, %v273
    %v1136 = vrot.slane %v1134, 2
    %1137 = vrot.lane.b32.xlu0 %v1136, 64
    %v1138 = vpop.permute.xlu0 %1137
    %v1140 = vmul.f32 %v1133, %v1138
    %1142 = vrot.lane.b32.xlu0 %v1140, 64
    %v1143 = vpop.permute.xlu0 %1142
    %v1145 = vadd.f32 %v221, %v1143
    %v1146 = vtanh.pop %v1145
    %v1148 = vrot.slane %v1146, 2
    %v1150 = vsub.f32 %v1038, %v1148
    %v1152 = vrot.slane %v1150, 6
    %1153 = vrot.lane.b32.xlu0 %v1152, 96
    %v1154 = vpop.permute.xlu0 %1153
    %v1156 = vmul.f32 %v1133, %v1154
    %1158 = vrot.lane.b32.xlu0 %v1156, 32
    %v1159 = vpop.permute.xlu0 %1158
    %v1161 = vadd.f32 %v1146, %v1159
    %1163 = vrot.lane.b32.xlu0 %v1161, 64
    %v1164 = vpop.permute.xlu0 %1163
    %v1167 = vrot.slane %v1100, 2
    %1168 = vrot.lane.b32.xlu0 %v1167, 96
    %v1169 = vpop.permute.xlu0 %1168
    %v1171 = vsel %vm241, %v1164, %v1169
    %v1173 = vrot.slane %v1171, 6
    %v1174 = vsel %vm311, %v1173, 0
    %1176 = vmatpush.msra.mxu0 0.0
    %1177 = vmatpush.msra.mxu0 0.0
    %1178 = vmatpush.msra.mxu0 0.0
    %1179 = vmatpush.msra.mxu0 0.0
    %1180 = vmatpush.msra.mxu0 0.0
    %1181 = vmatpush.msra.mxu0 0.0
    %1182 = vmatpush.msra.mxu0 0.0
    %1183 = vmatpush.msra.mxu0 0.0
    %1184 = vmatpush.msra.mxu0 %v235
    %1185 = vmatpush.msra.mxu0 %v234
    %1186 = vmatpush.msra.mxu0 %v233
    %1187 = vmatpush.msra.mxu0 %v232
    %1188 = vmatpush.msra.mxu0 %v231
    %1189 = vmatpush.msra.mxu0 %v230
    %1190 = vmatpush.msra.mxu0 %v229
    %1191 = vmatpush.msra.mxu0 %v228
    %1192 = vmatmul.f32.gmra.mxu0 %v1174
    %v1193 = vpop.f32.mrf.mxu0
    %v1194 = vadd.f32 0.0, %v1193
    %1195 = vdwg.mxu0
    %v1196 = vadd.f32 %v1194, %v336
    %v1197 = vmul.f32 %v1196, 0.5
    %v1198 = vtanh.pop %v1197
    %v1199 = vmul.f32 %v1198, 0.5
    %v1200 = vadd.f32 %v1199, 0.5
    %v1201 = vadd.f32 %v1194, %v346
    %1203 = vrot.lane.b32.xlu0 %v1201, 32
    %v1204 = vpop.permute.xlu0 %1203
    %v1206 = vmul.f32 %v1200, %v1204
    %1208 = vrot.lane.b32.xlu0 %v1206, 64
    %v1209 = vpop.permute.xlu0 %1208
    %v1211 = vadd.f32 %v1196, %v1209
    %v1212 = vtanh.pop %v1211
    %v1213 = vsub.f32 %v1100, %v1212
    %1215 = vrot.lane.b32.xlu0 %v1213, 96
    %v1216 = vpop.permute.xlu0 %1215
    %v1218 = vmul.f32 %v1200, %v1216
    %1220 = vrot.lane.b32.xlu0 %v1218, 32
    %v1221 = vpop.permute.xlu0 %1220
    %v1223 = vadd.f32 %v1212, %v1221
    %vm1224 = vcmask 261126
    %1225 = vst.msk [vmem:[#allocation13 - $0x6] sm:$0xc0] %vm1224, %v1164
    %1227 = vrot.lane.b32.xlu0 %v1223, 64
    %v1228 = vpop.permute.xlu0 %1227
    %s1230 = scalar_lea.vmem [#allocation13], 2
    %vm1231 = vcmask 254976
    %1232 = vst.msk [vmem:[%s1230] sm:$0x3] %vm1231, %v1228
    %v1233 = vrot.slane %v494, 6
    %v1235 = vrot.slane %v617, 4
    %v1237 = vrot.slane %v740, 2
    %v1239 = vrot.slane %v977, 6
    %v1241 = vrot.slane %v1100, 4
    %v1243 = vrot.slane %v1223, 2
    %vm1245 = vcmask 1041408
    %v1246 = vsel %vm1245, %v374, %v1233
    %vm1247 = vcmask 1043456
    %v1248 = vsel %vm1247, %v1246, %v1235
    %vm1249 = vcmask 1045504
    %v1250 = vsel %vm1249, %v1248, %v1237
    %v1251 = vsel %vm1245, %v857, %v1239
    %v1252 = vsel %vm1247, %v1251, %v1241
    %v1253 = vsel %vm1249, %v1252, %v1243
    %v1254 = vld [vmem:[#allocation8] sm:$0xff]
    %v1255 = vld [vmem:[#allocation8 + $0x8] sm:$0xff]
    %v1256 = vld [vmem:[#allocation8 + $0x10] sm:$0xff]
    %v1257 = vld [vmem:[#allocation8 + $0x18] sm:$0xff]
    %v1258 = vld [vmem:[#allocation10] sm:$0x1]
    %v1260 = vperm.slane %v1258, 0
    %1264 = vrot.lane.b32.xlu0 %v1250, 64
    %v1265 = vpop.permute.xlu0 %1264
    %1266 = vrot.lane.b32.xlu0 %v1253, 64
    %v1267 = vpop.permute.xlu0 %1266
    %v1268 = vsel %vm241, %v1265, 0
    %v1270 = vsel %vm241, %v1267, 0
    %1272 = vmatpush.msra.mxu0 0.0
    %1273 = vmatpush.msra.mxu0 0.0
    %1274 = vmatpush.msra.mxu0 0.0
    %1275 = vmatpush.msra.mxu0 0.0
    %1276 = vmatpush.msra.mxu0 0.0
    %1277 = vmatpush.msra.mxu0 0.0
    %1278 = vmatpush.msra.mxu0 0.0
    %1279 = vmatpush.msra.mxu0 0.0
    %1280 = vmatpush.msra.mxu0 0.0
    %1281 = vmatpush.msra.mxu0 0.0
    %1282 = vmatpush.msra.mxu0 0.0
    %1283 = vmatpush.msra.mxu0 0.0
    %1284 = vmatpush.msra.mxu0 %v1257
    %1285 = vmatpush.msra.mxu0 %v1256
    %1286 = vmatpush.msra.mxu0 %v1255
    %1287 = vmatpush.msra.mxu0 %v1254
    %1288 = vmatmul.f32.gmra.mxu0 %v1268
    %v1289 = vpop.f32.mrf.mxu0
    %v1290 = vadd.f32 %v1260, %v1289
    %1291 = vmatmul.f32.gmra.mxu0 %v1270
    %v1292 = vpop.f32.mrf.mxu0
    %v1293 = vadd.f32 %v1260, %v1292
    %1294 = vdwg.mxu0
    %v1295 = vmax.f32 %v1290, 0.0
    %v1296 = vmax.f32 %v1293, 0.0
    %v1297 = vld [vmem:[%s12] sm:$0xff]
    %v1298 = vld [vmem:[%s12 + $0x8] sm:$0xff]
    %v1299 = vld [vmem:[%s12 + $0x10] sm:$0xff]
    %v1300 = vld [vmem:[%s12 + $0x18] sm:$0xff]
    %v1301 = vld [vmem:[#allocation11] sm:$0x1]
    %v1303 = vperm.slane %v1301, 0
    %v1306 = vsel %vm241, %v1295, 0
    %v1309 = vsel %vm241, %v1296, 0
    %1311 = vmatpush.msra.mxu0 0.0
    %1312 = vmatpush.msra.mxu0 0.0
    %1313 = vmatpush.msra.mxu0 0.0
    %1314 = vmatpush.msra.mxu0 0.0
    %1315 = vmatpush.msra.mxu0 0.0
    %1316 = vmatpush.msra.mxu0 0.0
    %1317 = vmatpush.msra.mxu0 0.0
    %1318 = vmatpush.msra.mxu0 0.0
    %1319 = vmatpush.msra.mxu0 0.0
    %1320 = vmatpush.msra.mxu0 0.0
    %1321 = vmatpush.msra.mxu0 0.0
    %1322 = vmatpush.msra.mxu0 0.0
    %1323 = vmatpush.msra.mxu0 %v1300
    %1324 = vmatpush.msra.mxu0 %v1299
    %1325 = vmatpush.msra.mxu0 %v1298
    %1326 = vmatpush.msra.mxu0 %v1297
    %1327 = vmatmul.f32.gmra.mxu0 %v1306
    %v1328 = vpop.f32.mrf.mxu0
    %v1329 = vadd.f32 %v1303, %v1328
    %1330 = vmatmul.f32.gmra.mxu0 %v1309
    %v1331 = vpop.f32.mrf.mxu0
    %v1332 = vadd.f32 %v1303, %v1331
    %1333 = vdwg.mxu0
    %1334 = vst.msk [vmem:[%s14] sm:$0xff] %vm158, %v1329
    %1335 = vst.msk [vmem:[%s14 + $0x8] sm:$0xff] %vm158, %v1332
    // Predicated region
    $region82: #{char_rnn_forward.1} parent=1 // pred_check
      _
    $region83: #{char_rnn_forward.1} parent=1 // pred_check_branch
      %1337 = sbr.rel (0) target = $region85
    $region84: #{char_rnn_forward.1} parent=1 // pred_region
      _
    $region85: #{char_rnn_forward.1} parent=1 // pred_fallthru
      _
    // Predicated region
    $region86: #{char_rnn_forward.1} parent=1 // pred_check
      _
    $region87: #{char_rnn_forward.1} parent=1 // pred_check_branch
      %1339 = sbr.rel (0) target = $region89
    $region88: #{char_rnn_forward.1} parent=1 // pred_region
      %1341 = vsyncadd [#allocation4], 0
      %s1342 = sshll.u32 [#allocation13], 4
      %s1343 = int_to_ptr.vmem [resolvable:$true] %s1342
      %s1344 = sshll.u32 %s15, 4
      %s1345 = int_to_ptr.hbm [resolvable:$true] %s1344
      %1350 = dma.vmem_to_hbm [thread:$0]  %s1343, 64, %s1345, [#allocation4], 32, 32, 2
    $region89: #{char_rnn_forward.1} parent=1 // pred_fallthru
      _
    // Predicated region
    $region90: #{char_rnn_forward.1} parent=1 // pred_check
      _
    $region91: #{char_rnn_forward.1} parent=1 // pred_check_branch
      %1352 = sbr.rel (0) target = $region93
    $region92: #{char_rnn_forward.1} parent=1 // pred_region
      _
    $region93: #{char_rnn_forward.1} parent=1 // pred_fallthru
      _
    // Predicated region
    $region94: #{char_rnn_forward.1} parent=1 // pred_check
      _
    $region95: #{char_rnn_forward.1} parent=1 // pred_check_branch
      %1354 = sbr.rel (0) target = $region97
    $region96: #{char_rnn_forward.1} parent=1 // pred_region
      %1356 = dma.done [#allocation4], 64
    $region97: #{char_rnn_forward.1} parent=1 // pred_fallthru
      _
    %1357 = vsyncpa [#allocation3], 1
    %1358 = vsyncpa [#allocation6], 1
    %1359 = vsyncpa [#allocation9], 1
    %1360 = vsyncpa [#allocation12], 1
    %1361 = vsyncpa [#allocation4], 1

</llo_original>
